<compile_context>
chip_gen: v7x
topology: tpu7x:2x2x1
jax: 0.10.0
libtpu: 0.0.40
codegen_flags: <defaults>
</compile_context>

<pallas_src>
import jax
import jax.numpy as jnp
from jax.experimental import pallas as pl
from jax.experimental.pallas import tpu as pltpu

OUT_W = 8  # output columns: 0 = q1, 1 = q2, 2 = std, rest zero-padding


# ----------------------------------------------------------------------------
# Pallas kernel
# ----------------------------------------------------------------------------
def _ensemble_critic_kernel(x_ref, w1f_ref, w25_ref, small_ref, out_ref):
    fused = w1f_ref.shape[1]           # 1024 (= 2 * 512)
    half = fused // 2                  # 512  (head-2 column offset, lane-aligned)
    k2 = w25_ref.shape[1]              # 400  (second-layer contraction dim)
    h2_dim = w25_ref.shape[2]          # 300

    # Small f32 params, packed into one lane-0-aligned (6, fused) array.
    b14 = small_ref[0:1, :]            # (1, 1024) = [b1 | 0 | b4 | 0]
    b2  = small_ref[1:2, 0:h2_dim]     # (1, 300)
    b5  = small_ref[2:3, 0:h2_dim]     # (1, 300)
    w3r = small_ref[3:4, 0:h2_dim]     # (1, 300)  row vector of l3 weight
    w6r = small_ref[4:5, 0:h2_dim]     # (1, 300)  row vector of l6 weight
    b3  = small_ref[5:6, 0:1]          # (1, 1)
    b6  = small_ref[5:6, 1:2]          # (1, 1)

    # bf16 on the MXU inputs, f32 accumulation / epilogue.
    x = x_ref[...].astype(jnp.bfloat16)                     # (B, in_dim)

    # Fused first layer of BOTH heads: one matmul -> (B, 1024).
    h = jnp.dot(x, w1f_ref[...], preferred_element_type=jnp.float32) + b14
    h = jnp.maximum(h, 0.0)

    # Per-head slices: both start on a 128-lane boundary -> free views.
    h1 = h[:, 0:k2].astype(jnp.bfloat16)                    # (B, 400)
    h2 = h[:, half:half + k2].astype(jnp.bfloat16)          # (B, 400)

    # Second layer per head (different weights -> two matmuls).
    g1 = jnp.maximum(
        jnp.dot(h1, w25_ref[0], preferred_element_type=jnp.float32) + b2, 0.0)
    g2 = jnp.maximum(
        jnp.dot(h2, w25_ref[1], preferred_element_type=jnp.float32) + b5, 0.0)

    # Final 300 -> 1 layers: VPU multiply + lane reduce (skip 1-wide MXU tiles).
    q1 = jnp.sum(g1 * w3r, axis=-1, keepdims=True) + b3     # (B, 1) f32
    q2 = jnp.sum(g2 * w6r, axis=-1, keepdims=True) + b6     # (B, 1) f32

    # Population std over a 2-member ensemble == 0.5 * |q1 - q2|.
    std_q = 0.5 * jnp.abs(q1 - q2)

    # Narrow (B, 8) output: col 0 = q1, col 1 = q2, col 2 = std, rest 0.
    lane = jax.lax.broadcasted_iota(jnp.int32, out_ref.shape, 1)
    out_ref[...] = jnp.where(lane == 0, q1,
                   jnp.where(lane == 1, q2,
                   jnp.where(lane == 2, std_q, 0.0)))


# ----------------------------------------------------------------------------
# Parameter packing (one-off): bf16 weights + packed small f32 params.
# Head-1 occupies fused cols [0, 400), head-2 cols [512, 912) (lane-aligned).
# ----------------------------------------------------------------------------
def pack_params(params):
    (w1, b1, w2, b2, w3, b3, w4, b4, w5, b5, w6, b6) = params
    in_dim = w1.shape[0]
    h1_dim = w1.shape[1]                              # 400
    h2_dim = w2.shape[1]                              # 300
    half = ((h1_dim + 127) // 128) * 128              # 512
    fused = 2 * half                                  # 1024

    # Fused, lane-aligned first-layer weight for both heads.
    w1f = jnp.zeros((in_dim, fused), jnp.float32)
    w1f = w1f.at[:, :h1_dim].set(w1)
    w1f = w1f.at[:, half:half + h1_dim].set(w4)
    w1f = w1f.astype(jnp.bfloat16)                    # (in_dim, 1024)

    # Second-layer weights stacked -> one DMA.
    w25 = jnp.stack([w2, w5], axis=0).astype(jnp.bfloat16)   # (2, 400, 300)

    # All small f32 params in one lane-aligned buffer.
    small = jnp.zeros((6, fused), jnp.float32)
    small = small.at[0, :h1_dim].set(b1[0])
    small = small.at[0, half:half + h1_dim].set(b4[0])
    small = small.at[1, :h2_dim].set(b2[0])
    small = small.at[2, :h2_dim].set(b5[0])
    small = small.at[3, :h2_dim].set(w3[:, 0])
    small = small.at[4, :h2_dim].set(w6[:, 0])
    small = small.at[5, 0].set(b3[0, 0])
    small = small.at[5, 1].set(b6[0, 0])
    return (w1f, w25, small)


# ----------------------------------------------------------------------------
# Wrapper
# ----------------------------------------------------------------------------
def ensemble_critic_forward(state, action, packed, with_var=False,
                            block_b=1024, min_grid_steps=1):
    """Equivalent of EnsembleCritic.forward(state, action, with_var).

    block_b:        max batch-tile size (tiles are cheap: weights stay resident).
    min_grid_steps: set to 2 on v7x for large batches so both TensorCores work.
    """
    w1f, w25, small = packed
    b = state.shape[0]

    # Single concatenated f32 input -> one DMA, one first-layer contraction.
    x = jnp.concatenate([state.astype(jnp.float32),
                         action.astype(jnp.float32)], axis=1)
    in_dim = x.shape[1]

    if b <= block_b and min_grid_steps <= 1:
        tb, bp = b, b                                 # single grid step
    else:
        steps = max(min_grid_steps, pl.cdiv(b, block_b))
        tb = pl.cdiv(b, steps)
        tb = ((tb + 7) // 8) * 8                      # sublane-aligned tile
        bp = pl.cdiv(b, tb) * tb
        if bp != b:
            x = jnp.pad(x, ((0, bp - b), (0, 0)))
    grid = (bp // tb,)

    out = pl.pallas_call(
        _ensemble_critic_kernel,
        out_shape=jax.ShapeDtypeStruct((bp, OUT_W), jnp.float32),
        grid=grid,
        in_specs=[
            pl.BlockSpec((tb, in_dim), lambda i: (i, 0)),     # batch tile
            pl.BlockSpec(w1f.shape, lambda i: (0, 0)),        # weights stay
            pl.BlockSpec(w25.shape, lambda i: (0, 0, 0)),     #  resident in
            pl.BlockSpec(small.shape, lambda i: (0, 0)),      #  VMEM across steps
        ],
        out_specs=pl.BlockSpec((tb, OUT_W), lambda i: (i, 0)),
        compiler_params=pltpu.CompilerParams(
            dimension_semantics=("parallel",)),
    )(x, w1f, w25, small)

    q1 = out[:b, 0:1]
    q2 = out[:b, 1:2]
    all_qs = jnp.stack([q1, q2], axis=0)                      # (2, B, 1)
    if with_var:
        return all_qs, out[:b, 2:3]
    return all_qs


# ----------------------------------------------------------------------------
# Deterministic parameter init (PyTorch nn.Linear default: U(-1/sqrt(fan_in), +))
# Weights stored as (in_features, out_features); biases as (1, out_features).
# ----------------------------------------------------------------------------
def init_params(key, state_dim, action_dim):
    in_dim = state_dim + action_dim
    layer_dims = [(in_dim, 400), (400, 300), (300, 1),   # q1 head: l1, l2, l3
                  (in_dim, 400), (400, 300), (300, 1)]   # q2 head: l4, l5, l6
    params = []
    for (fan_in, fan_out) in layer_dims:
        key, kw, kb = jax.random.split(key, 3)
        bound = 1.0 / jnp.sqrt(float(fan_in))
        w = jax.random.uniform(kw, (fan_in, fan_out), jnp.float32, -bound, bound)
        bb = jax.random.uniform(kb, (1, fan_out), jnp.float32, -bound, bound)
        params.extend([w, bb])
    return tuple(params)


# ----------------------------------------------------------------------------
# Pure-JAX reference mirroring the kernel precision policy (bf16 matmul
# inputs, f32 accumulation / bias / ReLU), same math as the PyTorch module.
# ----------------------------------------------------------------------------
def reference_forward(state, action, params):
    x = jnp.concatenate([state, action], axis=1).astype(jnp.float32)
    (w1, b1, w2, b2, w3, b3, w4, b4, w5, b5, w6, b6) = params

    def qnet(wa, ba, wb, bb, wc, bc):
        h = jnp.dot(x.astype(jnp.bfloat16), wa.astype(jnp.bfloat16),
                    preferred_element_type=jnp.float32) + ba
        h = jnp.maximum(h, 0.0)
        h = jnp.dot(h.astype(jnp.bfloat16), wb.astype(jnp.bfloat16),
                    preferred_element_type=jnp.float32) + bb
        h = jnp.maximum(h, 0.0)
        return jnp.dot(h, wc) + bc                      # f32 output layer

    q1 = qnet(w1, b1, w2, b2, w3, b3)
    q2 = qnet(w4, b4, w5, b5, w6, b6)
    all_qs = jnp.stack([q1, q2], axis=0)
    std_q = jnp.std(all_qs, axis=0)                     # population std
    return all_qs, std_q


if __name__ == "__main__":
    key = jax.random.PRNGKey(0)
    batch, state_dim, action_dim = 8, 17, 6

    key, ks, ka, kp = jax.random.split(key, 4)
    state = jax.random.normal(ks, (batch, state_dim), jnp.float32)
    action = jax.random.normal(ka, (batch, action_dim), jnp.float32)
    params = init_params(kp, state_dim, action_dim)
    packed = pack_params(params)

    # Small-batch path (single grid step).
    all_qs, std_q = ensemble_critic_forward(state, action, packed, with_var=True)
    all_qs = jax.block_until_ready(all_qs)
    std_q = jax.block_until_ready(std_q)

    ref_qs, ref_std = reference_forward(state, action, params)
    assert all_qs.shape == (2, batch, 1)
    assert std_q.shape == (batch, 1)
    assert jnp.allclose(all_qs, ref_qs, atol=1e-3, rtol=1e-3)
    assert jnp.allclose(std_q, ref_std, atol=1e-3, rtol=1e-3)

    # Larger batch exercising the tiled grid + padding path (block_b forced low).
    bb = 300
    key, ks2, ka2 = jax.random.split(key, 3)
    state2 = jax.random.normal(ks2, (bb, state_dim), jnp.float32)
    action2 = jax.random.normal(ka2, (bb, action_dim), jnp.float32)
    all_qs2, std_q2 = ensemble_critic_forward(state2, action2, packed,
                                              with_var=True, block_b=256)
    all_qs2 = jax.block_until_ready(all_qs2)
    ref_qs2, ref_std2 = reference_forward(state2, action2, params)
    assert all_qs2.shape == (2, bb, 1)
    assert jnp.allclose(all_qs2, ref_qs2, atol=1e-3, rtol=1e-3)
    assert jnp.allclose(std_q2, ref_std2, atol=1e-3, rtol=1e-3)

    # Forced 2-step grid (v7x two-TensorCore path).
    all_qs3, std_q3 = ensemble_critic_forward(state2, action2, packed,
                                              with_var=True, min_grid_steps=2)
    all_qs3 = jax.block_until_ready(all_qs3)
    assert jnp.allclose(all_qs3, ref_qs2, atol=1e-3, rtol=1e-3)
    assert jnp.allclose(std_q3, ref_std2, atol=1e-3, rtol=1e-3)

    print("KERNEL_OK")
</pallas_src>

<mosaic_0001>
module attributes {stable_mosaic.version = 11 : i64} {
  func.func @_ensemble_critic_kernel(%arg0: i32, %arg1: memref<8x23xf32, #tpu.memory_space<vmem>>, %arg2: memref<23x1024xbf16, #tpu.memory_space<vmem>>, %arg3: memref<2x400x300xbf16, #tpu.memory_space<vmem>>, %arg4: memref<6x1024xf32, #tpu.memory_space<vmem>>, %arg5: memref<8x8xf32, #tpu.memory_space<vmem>>) attributes {dimension_semantics = [#tpu.dimension_semantics<parallel>], iteration_bounds = array<i64: 1>, scalar_prefetch = 0 : i64, scratch_operands = 0 : i64, tpu.core_type = #tpu.core_type<tc>, window_params = [{transform_indices = @transform_0, window_bounds = array<i64: 8, 23>}, {pipeline_mode = #tpu.pipeline_mode<synchronous>, transform_indices = @transform_1, window_bounds = array<i64: 23, 1024>}, {pipeline_mode = #tpu.pipeline_mode<synchronous>, transform_indices = @transform_2, window_bounds = array<i64: 2, 400, 300>}, {pipeline_mode = #tpu.pipeline_mode<synchronous>, transform_indices = @transform_3, window_bounds = array<i64: 6, 1024>}, {transform_indices = @transform_4, window_bounds = array<i64: 8, 8>}]} {
    %c0 = arith.constant 0 : index
    %c0_0 = arith.constant 0 : index
    %0 = vector.load %arg4[%c0, %c0_0] : memref<6x1024xf32, #tpu.memory_space<vmem>>, vector<1x1024xf32>
    %c1 = arith.constant 1 : index
    %c0_1 = arith.constant 0 : index
    %1 = vector.load %arg4[%c1, %c0_1] : memref<6x1024xf32, #tpu.memory_space<vmem>>, vector<1x300xf32>
    %c2 = arith.constant 2 : index
    %c0_2 = arith.constant 0 : index
    %2 = vector.load %arg4[%c2, %c0_2] : memref<6x1024xf32, #tpu.memory_space<vmem>>, vector<1x300xf32>
    %c3 = arith.constant 3 : index
    %c0_3 = arith.constant 0 : index
    %3 = vector.load %arg4[%c3, %c0_3] : memref<6x1024xf32, #tpu.memory_space<vmem>>, vector<1x300xf32>
    %c4 = arith.constant 4 : index
    %c0_4 = arith.constant 0 : index
    %4 = vector.load %arg4[%c4, %c0_4] : memref<6x1024xf32, #tpu.memory_space<vmem>>, vector<1x300xf32>
    %c5 = arith.constant 5 : index
    %c0_5 = arith.constant 0 : index
    %5 = vector.load %arg4[%c5, %c0_5] : memref<6x1024xf32, #tpu.memory_space<vmem>>, vector<1x1xf32>
    %c5_6 = arith.constant 5 : index
    %c1_7 = arith.constant 1 : index
    %6 = vector.load %arg4[%c5_6, %c1_7] : memref<6x1024xf32, #tpu.memory_space<vmem>>, vector<1x1xf32>
    %c0_8 = arith.constant 0 : index
    %c0_9 = arith.constant 0 : index
    %7 = vector.load %arg1[%c0_8, %c0_9] : memref<8x23xf32, #tpu.memory_space<vmem>>, vector<8x23xf32>
    %8 = arith.truncf %7 : vector<8x23xf32> to vector<8x23xbf16>
    %c0_10 = arith.constant 0 : index
    %c0_11 = arith.constant 0 : index
    %9 = vector.load %arg2[%c0_10, %c0_11] : memref<23x1024xbf16, #tpu.memory_space<vmem>>, vector<23x1024xbf16>
    %cst = arith.constant dense<0.000000e+00> : vector<8x1024xf32>
    %10 = tpu.matmul %8, %9, %cst {dimension_numbers = #tpu.dot_dimension_numbers<[1], [0], [0], [1], [0, 0, 1, 1], [], []>} : vector<8x23xbf16>, vector<23x1024xbf16>, vector<8x1024xf32> -> vector<8x1024xf32>
    %11 = vector.broadcast %0 : vector<1x1024xf32> to vector<8x1024xf32>
    %12 = arith.addf %10, %11 : vector<8x1024xf32>
    %cst_12 = arith.constant 0.000000e+00 : f32
    %13 = vector.broadcast %cst_12 : f32 to vector<8x1024xf32>
    %14 = arith.maximumf %12, %13 : vector<8x1024xf32>
    %15 = vector.extract_strided_slice %14 {offsets = [0, 0], sizes = [8, 400], strides = [1, 1]} : vector<8x1024xf32> to vector<8x400xf32>
    %16 = arith.truncf %15 : vector<8x400xf32> to vector<8x400xbf16>
    %17 = vector.extract_strided_slice %14 {offsets = [0, 512], sizes = [8, 400], strides = [1, 1]} : vector<8x1024xf32> to vector<8x400xf32>
    %18 = arith.truncf %17 : vector<8x400xf32> to vector<8x400xbf16>
    %c0_13 = arith.constant 0 : index
    %c0_14 = arith.constant 0 : index
    %c0_15 = arith.constant 0 : index
    %19 = vector.load %arg3[%c0_13, %c0_14, %c0_15] : memref<2x400x300xbf16, #tpu.memory_space<vmem>>, vector<1x400x300xbf16>
    %20 = vector.shape_cast %19 : vector<1x400x300xbf16> to vector<400x300xbf16>
    %cst_16 = arith.constant dense<0.000000e+00> : vector<8x300xf32>
    %21 = tpu.matmul %16, %20, %cst_16 {dimension_numbers = #tpu.dot_dimension_numbers<[1], [0], [0], [1], [0, 0, 1, 1], [], []>} : vector<8x400xbf16>, vector<400x300xbf16>, vector<8x300xf32> -> vector<8x300xf32>
    %22 = vector.broadcast %1 : vector<1x300xf32> to vector<8x300xf32>
    %23 = arith.addf %21, %22 : vector<8x300xf32>
    %cst_17 = arith.constant 0.000000e+00 : f32
    %24 = vector.broadcast %cst_17 : f32 to vector<8x300xf32>
    %25 = arith.maximumf %23, %24 : vector<8x300xf32>
    %c1_18 = arith.constant 1 : index
    %c0_19 = arith.constant 0 : index
    %c0_20 = arith.constant 0 : index
    %26 = vector.load %arg3[%c1_18, %c0_19, %c0_20] : memref<2x400x300xbf16, #tpu.memory_space<vmem>>, vector<1x400x300xbf16>
    %27 = vector.shape_cast %26 : vector<1x400x300xbf16> to vector<400x300xbf16>
    %cst_21 = arith.constant dense<0.000000e+00> : vector<8x300xf32>
    %28 = tpu.matmul %18, %27, %cst_21 {dimension_numbers = #tpu.dot_dimension_numbers<[1], [0], [0], [1], [0, 0, 1, 1], [], []>} : vector<8x400xbf16>, vector<400x300xbf16>, vector<8x300xf32> -> vector<8x300xf32>
    %29 = vector.broadcast %2 : vector<1x300xf32> to vector<8x300xf32>
    %30 = arith.addf %28, %29 : vector<8x300xf32>
    %cst_22 = arith.constant 0.000000e+00 : f32
    %31 = vector.broadcast %cst_22 : f32 to vector<8x300xf32>
    %32 = arith.maximumf %30, %31 : vector<8x300xf32>
    %33 = vector.broadcast %3 : vector<1x300xf32> to vector<8x300xf32>
    %34 = arith.mulf %25, %33 : vector<8x300xf32>
    %cst_23 = arith.constant dense<0.000000e+00> : vector<8xf32>
    %35 = vector.multi_reduction <add>, %34, %cst_23 [1] : vector<8x300xf32> to vector<8xf32>
    %36 = vector.shape_cast %35 : vector<8xf32> to vector<8x1xf32>
    %37 = vector.broadcast %5 : vector<1x1xf32> to vector<8x1xf32>
    %38 = arith.addf %36, %37 : vector<8x1xf32>
    %39 = vector.broadcast %4 : vector<1x300xf32> to vector<8x300xf32>
    %40 = arith.mulf %32, %39 : vector<8x300xf32>
    %cst_24 = arith.constant dense<0.000000e+00> : vector<8xf32>
    %41 = vector.multi_reduction <add>, %40, %cst_24 [1] : vector<8x300xf32> to vector<8xf32>
    %42 = vector.shape_cast %41 : vector<8xf32> to vector<8x1xf32>
    %43 = vector.broadcast %6 : vector<1x1xf32> to vector<8x1xf32>
    %44 = arith.addf %42, %43 : vector<8x1xf32>
    %45 = arith.subf %38, %44 : vector<8x1xf32>
    %46 = math.absf %45 : vector<8x1xf32>
    %cst_25 = arith.constant 5.000000e-01 : f32
    %47 = vector.broadcast %cst_25 : f32 to vector<8x1xf32>
    %48 = arith.mulf %47, %46 : vector<8x1xf32>
    %49 = tpu.iota {dimensions = array<i32: 1>} : vector<8x8xi32>
    %c0_i32 = arith.constant 0 : i32
    %50 = vector.broadcast %c0_i32 : i32 to vector<8x8xi32>
    %51 = arith.cmpi eq, %49, %50 : vector<8x8xi32>
    %c1_i32 = arith.constant 1 : i32
    %52 = vector.broadcast %c1_i32 : i32 to vector<8x8xi32>
    %53 = arith.cmpi eq, %49, %52 : vector<8x8xi32>
    %c2_i32 = arith.constant 2 : i32
    %54 = vector.broadcast %c2_i32 : i32 to vector<8x8xi32>
    %55 = arith.cmpi eq, %49, %54 : vector<8x8xi32>
    %cst_26 = arith.constant 0.000000e+00 : f32
    %56 = vector.shape_cast %48 : vector<8x1xf32> to vector<8x1xf32>
    %57 = vector.broadcast %56 : vector<8x1xf32> to vector<8x8xf32>
    %58 = vector.broadcast %cst_26 : f32 to vector<8x8xf32>
    %59 = arith.select %55, %57, %58 : vector<8x8xi1>, vector<8x8xf32>
    %60 = vector.shape_cast %44 : vector<8x1xf32> to vector<8x1xf32>
    %61 = vector.broadcast %60 : vector<8x1xf32> to vector<8x8xf32>
    %62 = arith.select %53, %61, %59 : vector<8x8xi1>, vector<8x8xf32>
    %63 = vector.shape_cast %38 : vector<8x1xf32> to vector<8x1xf32>
    %64 = vector.broadcast %63 : vector<8x1xf32> to vector<8x8xf32>
    %65 = arith.select %51, %64, %62 : vector<8x8xi1>, vector<8x8xf32>
    %c0_27 = arith.constant 0 : index
    %c0_28 = arith.constant 0 : index
    %66 = vector.load %arg5[%c0_27, %c0_28] : memref<8x8xf32, #tpu.memory_space<vmem>>, vector<8x8xf32>
    tpu.vector_store %arg5[%c0_27, %c0_28], %65 {strides = array<i32>} : memref<8x8xf32, #tpu.memory_space<vmem>>, vector<8x8xf32>,
    return
  }
  func.func @transform_0(%arg0: i32) -> (i32, i32) {
    %c0_i32 = arith.constant 0 : i32
    %c0_i32_0 = arith.constant 0 : i32
    return %arg0, %c0_i32 : i32, i32
  }
  func.func @transform_1(%arg0: i32) -> (i32, i32) {
    %c0_i32 = arith.constant 0 : i32
    %c0_i32_0 = arith.constant 0 : i32
    %c0_i32_1 = arith.constant 0 : i32
    return %c0_i32, %c0_i32_0 : i32, i32
  }
  func.func @transform_2(%arg0: i32) -> (i32, i32, i32) {
    %c0_i32 = arith.constant 0 : i32
    %c0_i32_0 = arith.constant 0 : i32
    %c0_i32_1 = arith.constant 0 : i32
    %c0_i32_2 = arith.constant 0 : i32
    return %c0_i32, %c0_i32_0, %c0_i32_1 : i32, i32, i32
  }
  func.func @transform_3(%arg0: i32) -> (i32, i32) {
    %c0_i32 = arith.constant 0 : i32
    %c0_i32_0 = arith.constant 0 : i32
    %c0_i32_1 = arith.constant 0 : i32
    return %c0_i32, %c0_i32_0 : i32, i32
  }
  func.func @transform_4(%arg0: i32) -> (i32, i32) {
    %c0_i32 = arith.constant 0 : i32
    %c0_i32_0 = arith.constant 0 : i32
    return %arg0, %c0_i32 : i32, i32
  }
}

</mosaic_0001>

<llo_original>
// kernel: tpu_custom_call.1
$region0: #{tpu_custom_call.1}
  #allocation0 [shape = 'u32[]', space=smem, size = 0x4, offset = 0x4, fixed_abs, tag = 'smem constant byte address 0x4 - core index']
  #allocation1 [shape = 'u32[144,128]{1,0:T(1,128)}', space=vmem, size = 0x12000, scoped, tag = 'internal scratch']
  %s0 = inlined_call_operand.hbm [shape: f32[8,23], index: 0, kind: input, shape index: {}]
  %s1 = inlined_call_operand.hbm [shape: bf16[23,1024], index: 1, kind: input, shape index: {}]
  %s2 = inlined_call_operand.hbm [shape: bf16[2,400,300], index: 2, kind: input, shape index: {}]
  %s3 = inlined_call_operand.hbm [shape: f32[6,1024], index: 3, kind: input, shape index: {}]
  %s4 = inlined_call_operand.hbm [shape: f32[8,8], index: 4, kind: output, shape index: {}]
  %s5 = sld [smem:[#allocation0]]
  $region42: #{tpu_custom_call.1} parent=0
    _
  %s7 = ssub.s32 1, %s5
  %s8 = scalar_select 0, %s7, %s5
  $region1: #{tpu_custom_call.1} parent=0
    #allocation2 [shape = 'u8[4096]{0}', space=vmem, size = 0x1000, scoped, tag = 'input window, operand 0, single buffered']
    #allocation3 [shape = 's32[1]{0}', space=sflag, size = 0x4, scoped, tag = 'scoped memory for tpu_custom_call.1']
    #allocation4 [shape = 's32[1]{0}', space=sflag, size = 0x4, scoped, tag = 'scoped memory for tpu_custom_call.1']
    #allocation5 [shape = 'u8[49152]{0}', space=vmem, size = 0xc000, scoped, tag = 'input window, operand 1, single buffered']
    #allocation6 [shape = 's32[1]{0}', space=sflag, size = 0x4, scoped, tag = 'scoped memory for tpu_custom_call.1']
    #allocation7 [shape = 'u8[614400]{0}', space=vmem, size = 0x96000, scoped, tag = 'input window, operand 2, single buffered']
    #allocation8 [shape = 'u8[32768]{0}', space=vmem, size = 0x8000, scoped, tag = 'input window, operand 3, single buffered']
    #allocation9 [shape = 's32[1]{0}', space=sflag, size = 0x4, scoped, tag = 'scoped memory for tpu_custom_call.1']
    #allocation10 [shape = 'u8[4096]{0}', space=vmem, size = 0x1000, scoped, tag = 'output window, operand 0, single buffered']
    %9 = vsyncpa [#allocation3], 0
    %10 = vsyncpa [#allocation6], 0
    %11 = vsyncpa [#allocation9], 0
    %12 = vsyncpa [#allocation4], 0
    // Predicated region
    $region2: #{tpu_custom_call.1} parent=1 // pred_check
      _
    $region3: #{tpu_custom_call.1} parent=1 // pred_check_branch
      %14 = sbr.rel (0) target = $region5
    $region4: #{tpu_custom_call.1} parent=1 // pred_region
      %s16 = ssub.s32 128, 128
      %17 = vsyncadd [#allocation3], %s16
      %s19 = sshll.u32 [#allocation2], 4
      %s20 = int_to_ptr.vmem [resolvable:$true] %s19
      %22 = dma.hbm_to_vmem [thread:$0]  %s0, 128, %s20, [#allocation3]
    $region5: #{tpu_custom_call.1} parent=1 // pred_fallthru
      _
    // Predicated region
    $region6: #{tpu_custom_call.1} parent=1 // pred_check
      _
    $region7: #{tpu_custom_call.1} parent=1 // pred_check_branch
      %24 = sbr.rel (0) target = $region9
    $region8: #{tpu_custom_call.1} parent=1 // pred_region
      %s26 = ssub.s32 1536, 1536
      %27 = vsyncadd [#allocation6], %s26
      %s28 = sshll.u32 [#allocation5], 4
      %s29 = int_to_ptr.vmem [resolvable:$true] %s28
      %34 = dma.hbm_to_vmem [thread:$0]  %s1, 1536, %s29, [#allocation6], 512, 512, 32
    $region9: #{tpu_custom_call.1} parent=1 // pred_fallthru
      _
    // Predicated region
    $region10: #{tpu_custom_call.1} parent=1 // pred_check
      _
    $region11: #{tpu_custom_call.1} parent=1 // pred_check_branch
      %36 = sbr.rel (0) target = $region13
    $region12: #{tpu_custom_call.1} parent=1 // pred_region
      %s38 = ssub.s32 19200, 19200
      %39 = vsyncadd [#allocation6], %s38
      %s40 = sshll.u32 [#allocation7], 4
      %s41 = int_to_ptr.vmem [resolvable:$true] %s40
      %46 = dma.hbm_to_vmem [thread:$0]  %s2, 19200, %s41, [#allocation6], 192, 192, 12
    $region13: #{tpu_custom_call.1} parent=1 // pred_fallthru
      _
    // Predicated region
    $region14: #{tpu_custom_call.1} parent=1 // pred_check
      _
    $region15: #{tpu_custom_call.1} parent=1 // pred_check_branch
      %48 = sbr.rel (0) target = $region17
    $region16: #{tpu_custom_call.1} parent=1 // pred_region
      %s50 = ssub.s32 1024, 1024
      %51 = vsyncadd [#allocation9], %s50
      %s53 = sshll.u32 [#allocation8], 4
      %s54 = int_to_ptr.vmem [resolvable:$true] %s53
      %56 = dma.hbm_to_vmem [thread:$0]  %s3, 1024, %s54, [#allocation9]
    $region17: #{tpu_custom_call.1} parent=1 // pred_fallthru
      _
    // Predicated region
    $region18: #{tpu_custom_call.1} parent=1 // pred_check
      _
    $region19: #{tpu_custom_call.1} parent=1 // pred_check_branch
      %58 = sbr.rel (0) target = $region21
    $region20: #{tpu_custom_call.1} parent=1 // pred_region
      %59 = dma.done [#allocation3], 128
    $region21: #{tpu_custom_call.1} parent=1 // pred_fallthru
      _
    // Predicated region
    $region22: #{tpu_custom_call.1} parent=1 // pred_check
      _
    $region23: #{tpu_custom_call.1} parent=1 // pred_check_branch
      %61 = sbr.rel (0) target = $region25
    $region24: #{tpu_custom_call.1} parent=1 // pred_region
      %62 = dma.done [#allocation6], 1536
    $region25: #{tpu_custom_call.1} parent=1 // pred_fallthru
      _
    // Predicated region
    $region26: #{tpu_custom_call.1} parent=1 // pred_check
      _
    $region27: #{tpu_custom_call.1} parent=1 // pred_check_branch
      %64 = sbr.rel (0) target = $region29
    $region28: #{tpu_custom_call.1} parent=1 // pred_region
      %65 = dma.done [#allocation6], 19200
    $region29: #{tpu_custom_call.1} parent=1 // pred_fallthru
      _
    // Predicated region
    $region30: #{tpu_custom_call.1} parent=1 // pred_check
      _
    $region31: #{tpu_custom_call.1} parent=1 // pred_check_branch
      %67 = sbr.rel (0) target = $region33
    $region32: #{tpu_custom_call.1} parent=1 // pred_region
      %68 = dma.done [#allocation9], 1024
    $region33: #{tpu_custom_call.1} parent=1 // pred_fallthru
      _
    %v70 = vld [vmem:[#allocation8] ss:$8 sm:$0xf]
    %v71 = vld [vmem:[#allocation8] ss:$8 sm:$0xf0]
    %v72 = vor.u32 %v70, %v71
    %s73 = scalar_lea.vmem [#allocation8], 1
    %v74 = vld [vmem:[%s73] ss:$8 sm:$0x7]
    %s75 = scalar_lea.vmem [#allocation8], 2
    %v76 = vld [vmem:[%s75] ss:$8 sm:$0x7]
    %s77 = scalar_lea.vmem [#allocation8], 3
    %v78 = vld [vmem:[%s77] ss:$8 sm:$0x7]
    %s79 = scalar_lea.vmem [#allocation8], 4
    %v80 = vld [vmem:[%s79] ss:$8 sm:$0x7]
    %v81 = vld [vmem:[#allocation8 + $0x5] ss:$0 sm:$0xff]
    %v82 = vld [vmem:[#allocation2] sm:$0xff]
    %v83 = vpack.c.bf16 %v82, %v82
    %v84 = vld [vmem:[#allocation5] sm:$0xff]
    %v85 = vld [vmem:[#allocation5 + $0x8] sm:$0xff]
    %v86 = vld [vmem:[#allocation5 + $0x10] sm:$0xff]
    %v87 = vld [vmem:[#allocation5 + $0x18] sm:$0xff]
    %v88 = vld [vmem:[#allocation5 + $0x20] sm:$0xff]
    %v89 = vld [vmem:[#allocation5 + $0x28] sm:$0xff]
    %v90 = vld [vmem:[#allocation5 + $0x30] sm:$0xff]
    %v91 = vld [vmem:[#allocation5 + $0x38] sm:$0xff]
    %v92 = vld [vmem:[#allocation5 + $0x40] sm:$0xff]
    %v93 = vld [vmem:[#allocation5 + $0x48] sm:$0xff]
    %v94 = vld [vmem:[#allocation5 + $0x50] sm:$0xff]
    %v95 = vld [vmem:[#allocation5 + $0x58] sm:$0xff]
    %v97 = vlaneseq
    %v98 = vshrl.u32 %v97, 7
    %v99 = vsub.s32 0, %v98
    %v100 = vrot.slane %v72, %v99
    %v101 = vlaneseq
    %v102 = vshrl.u32 %v101, 7
    %v103 = vsub.s32 1, %v102
    %v104 = vrot.slane %v72, %v103
    %v105 = vlaneseq
    %v106 = vshrl.u32 %v105, 7
    %v107 = vsub.s32 2, %v106
    %v108 = vrot.slane %v72, %v107
    %v109 = vlaneseq
    %v110 = vshrl.u32 %v109, 7
    %v111 = vsub.s32 3, %v110
    %v112 = vrot.slane %v72, %v111
    %v113 = vlaneseq
    %v114 = vshrl.u32 %v113, 7
    %v115 = vsub.s32 4, %v114
    %v116 = vrot.slane %v72, %v115
    %v117 = vlaneseq
    %v118 = vshrl.u32 %v117, 7
    %v119 = vsub.s32 5, %v118
    %v120 = vrot.slane %v72, %v119
    %v121 = vlaneseq
    %v122 = vshrl.u32 %v121, 7
    %v123 = vsub.s32 6, %v122
    %v124 = vrot.slane %v72, %v123
    %v125 = vlaneseq
    %v126 = vshrl.u32 %v125, 7
    %v127 = vsub.s32 7, %v126
    %v128 = vrot.slane %v72, %v127
    %v149 = vunpack.c.l.b16 %v84
    %v150 = vunpack.c.h.b16 %v84
    %v151 = vunpack.c.l.b16 %v85
    %v152 = vunpack.c.h.b16 %v85
    %v153 = vunpack.c.l.b16 %v86
    %v154 = vunpack.c.h.b16 %v86
    %v155 = vunpack.c.l.b16 %v87
    %v156 = vunpack.c.h.b16 %v87
    %v157 = vunpack.c.l.b16 %v88
    %v158 = vunpack.c.h.b16 %v88
    %v159 = vunpack.c.l.b16 %v89
    %v160 = vunpack.c.h.b16 %v89
    %v161 = vunpack.c.l.b16 %v90
    %v162 = vunpack.c.h.b16 %v90
    %v163 = vunpack.c.l.b16 %v91
    %v164 = vunpack.c.h.b16 %v91
    %v165 = vunpack.c.l.b16 %v92
    %v166 = vunpack.c.h.b16 %v92
    %v167 = vunpack.c.l.b16 %v93
    %v168 = vunpack.c.h.b16 %v93
    %v169 = vunpack.c.l.b16 %v94
    %v170 = vunpack.c.h.b16 %v94
    %v171 = vunpack.c.l.b16 %v95
    %v172 = vunpack.c.h.b16 %v95
    %v173 = vpack.c.b16 %v157, %v149
    %v174 = vpack.c.b16 %v158, %v150
    %v175 = vpack.c.b16 %v159, %v151
    %v176 = vpack.c.b16 %v160, %v152
    %v177 = vpack.c.b16 %v161, %v153
    %v178 = vpack.c.b16 %v162, %v154
    %v179 = vpack.c.b16 %v163, %v155
    %v180 = vpack.c.b16 %v164, %v156
    %v181 = vpack.c.b16 %v165, %v165
    %v182 = vpack.c.b16 %v166, %v166
    %v183 = vpack.c.b16 %v167, %v167
    %v184 = vpack.c.b16 %v168, %v168
    %v185 = vpack.c.b16 %v169, %v169
    %v186 = vpack.c.b16 %v170, %v170
    %v187 = vpack.c.b16 %v171, %v171
    %v188 = vpack.c.b16 %v172, %v172
    %vm197 = vcmask 187392
    %v199 = vsel %vm197, %v83, 0
    %vm201 = vcmask 1042432
    %vm202 = vcmask 1043456
    %v203 = vsel %vm201, 4294967295, 65535
    %v204 = vsel %vm202, %v203, 0
    %v206 = vand.u32 %v181, %v204
    %v209 = vand.u32 %v182, %v204
    %v212 = vand.u32 %v183, %v204
    %v215 = vand.u32 %v184, %v204
    %v218 = vand.u32 %v185, %v204
    %v221 = vand.u32 %v186, %v204
    %v224 = vand.u32 %v187, %v204
    %v227 = vand.u32 %v188, %v204
    %229 = vmatprep.subr.bf16.mxu0 %v174
    %230 = vmatpush1.bf16.msra.mxu0 %v173
    %231 = vmatprep.subr.bf16.mxu0 %v209
    %232 = vmatpush1.bf16.msra.mxu0 %v206
    %233 = vmatprep.subr.bf16.mxu0 0
    %234 = vmatpush1.bf16.msra.mxu0 0
    %235 = vmatprep.subr.bf16.mxu0 0
    %236 = vmatpush1.bf16.msra.mxu0 0
    %237 = vmatprep.subr.bf16.mxu0 0
    %238 = vmatpush1.bf16.msra.mxu0 0
    %239 = vmatprep.subr.bf16.mxu0 0
    %240 = vmatpush1.bf16.msra.mxu0 0
    %241 = vmatprep.subr.bf16.mxu0 0
    %242 = vmatpush1.bf16.msra.mxu0 0
    %243 = vmatprep.subr.bf16.mxu0 0
    %244 = vmatpush1.bf16.msra.mxu0 0
    %245 = vmatprep.subr.bf16.mxu0 0
    %246 = vmatpush1.bf16.msra.mxu0 0
    %247 = vmatprep.subr.bf16.mxu0 0
    %248 = vmatpush1.bf16.msra.mxu0 0
    %249 = vmatprep.subr.bf16.mxu0 0
    %250 = vmatpush1.bf16.msra.mxu0 0
    %251 = vmatprep.subr.bf16.mxu0 0
    %252 = vmatpush1.bf16.msra.mxu0 0
    %253 = vmatprep.subr.bf16.mxu0 0
    %254 = vmatpush1.bf16.msra.mxu0 0
    %255 = vmatprep.subr.bf16.mxu0 0
    %256 = vmatpush1.bf16.msra.mxu0 0
    %257 = vmatprep.subr.bf16.mxu0 0
    %258 = vmatpush1.bf16.msra.mxu0 0
    %259 = vmatprep.subr.bf16.mxu0 0
    %260 = vmatpush1.bf16.msra.mxu0 0
    %261 = vmatprep.mubr.bf16.mxu0 0
    %262 = vmatmul.mubr.bf16.gmra.mrb[0].mxu0 %v199
    %v263 = vpop.f32.mrb[0].mxu0
    %v264 = vadd.f32 %v100, %v263
    %v265 = vpop.f32.mrb[0].mxu0
    %v266 = vadd.f32 %v104, %v265
    %v267 = vpop.f32.mrb[0].mxu0
    %v268 = vpop.f32.mrb[0].mxu0
    %269 = vdwg.mxu0
    %270 = vmatprep.subr.bf16.mxu0 %v176
    %271 = vmatpush1.bf16.msra.mxu0 %v175
    %272 = vmatprep.subr.bf16.mxu0 %v215
    %273 = vmatpush1.bf16.msra.mxu0 %v212
    %274 = vmatprep.subr.bf16.mxu0 0
    %275 = vmatpush1.bf16.msra.mxu0 0
    %276 = vmatprep.subr.bf16.mxu0 0
    %277 = vmatpush1.bf16.msra.mxu0 0
    %278 = vmatprep.subr.bf16.mxu0 0
    %279 = vmatpush1.bf16.msra.mxu0 0
    %280 = vmatprep.subr.bf16.mxu0 0
    %281 = vmatpush1.bf16.msra.mxu0 0
    %282 = vmatprep.subr.bf16.mxu0 0
    %283 = vmatpush1.bf16.msra.mxu0 0
    %284 = vmatprep.subr.bf16.mxu0 0
    %285 = vmatpush1.bf16.msra.mxu0 0
    %286 = vmatprep.subr.bf16.mxu0 0
    %287 = vmatpush1.bf16.msra.mxu0 0
    %288 = vmatprep.subr.bf16.mxu0 0
    %289 = vmatpush1.bf16.msra.mxu0 0
    %290 = vmatprep.subr.bf16.mxu0 0
    %291 = vmatpush1.bf16.msra.mxu0 0
    %292 = vmatprep.subr.bf16.mxu0 0
    %293 = vmatpush1.bf16.msra.mxu0 0
    %294 = vmatprep.subr.bf16.mxu0 0
    %295 = vmatpush1.bf16.msra.mxu0 0
    %296 = vmatprep.subr.bf16.mxu0 0
    %297 = vmatpush1.bf16.msra.mxu0 0
    %298 = vmatprep.subr.bf16.mxu0 0
    %299 = vmatpush1.bf16.msra.mxu0 0
    %300 = vmatprep.subr.bf16.mxu0 0
    %301 = vmatpush1.bf16.msra.mxu0 0
    %302 = vmatprep.mubr.bf16.mxu0 0
    %303 = vmatmul.mubr.bf16.gmra.mrb[0].mxu0 %v199
    %v304 = vpop.f32.mrb[0].mxu0
    %v305 = vadd.f32 %v108, %v304
    %v306 = vpop.f32.mrb[0].mxu0
    %v307 = vadd.f32 %v112, %v306
    %v308 = vpop.f32.mrb[0].mxu0
    %v309 = vpop.f32.mrb[0].mxu0
    %310 = vdwg.mxu0
    %311 = vmatprep.subr.bf16.mxu0 %v178
    %312 = vmatpush1.bf16.msra.mxu0 %v177
    %313 = vmatprep.subr.bf16.mxu0 %v221
    %314 = vmatpush1.bf16.msra.mxu0 %v218
    %315 = vmatprep.subr.bf16.mxu0 0
    %316 = vmatpush1.bf16.msra.mxu0 0
    %317 = vmatprep.subr.bf16.mxu0 0
    %318 = vmatpush1.bf16.msra.mxu0 0
    %319 = vmatprep.subr.bf16.mxu0 0
    %320 = vmatpush1.bf16.msra.mxu0 0
    %321 = vmatprep.subr.bf16.mxu0 0
    %322 = vmatpush1.bf16.msra.mxu0 0
    %323 = vmatprep.subr.bf16.mxu0 0
    %324 = vmatpush1.bf16.msra.mxu0 0
    %325 = vmatprep.subr.bf16.mxu0 0
    %326 = vmatpush1.bf16.msra.mxu0 0
    %327 = vmatprep.subr.bf16.mxu0 0
    %328 = vmatpush1.bf16.msra.mxu0 0
    %329 = vmatprep.subr.bf16.mxu0 0
    %330 = vmatpush1.bf16.msra.mxu0 0
    %331 = vmatprep.subr.bf16.mxu0 0
    %332 = vmatpush1.bf16.msra.mxu0 0
    %333 = vmatprep.subr.bf16.mxu0 0
    %334 = vmatpush1.bf16.msra.mxu0 0
    %335 = vmatprep.subr.bf16.mxu0 0
    %336 = vmatpush1.bf16.msra.mxu0 0
    %337 = vmatprep.subr.bf16.mxu0 0
    %338 = vmatpush1.bf16.msra.mxu0 0
    %339 = vmatprep.subr.bf16.mxu0 0
    %340 = vmatpush1.bf16.msra.mxu0 0
    %341 = vmatprep.subr.bf16.mxu0 0
    %342 = vmatpush1.bf16.msra.mxu0 0
    %343 = vmatprep.mubr.bf16.mxu0 0
    %344 = vmatmul.mubr.bf16.gmra.mrb[0].mxu0 %v199
    %v345 = vpop.f32.mrb[0].mxu0
    %v346 = vadd.f32 %v116, %v345
    %v347 = vpop.f32.mrb[0].mxu0
    %v348 = vadd.f32 %v120, %v347
    %v349 = vpop.f32.mrb[0].mxu0
    %v350 = vpop.f32.mrb[0].mxu0
    %351 = vdwg.mxu0
    %352 = vmatprep.subr.bf16.mxu0 %v180
    %353 = vmatpush1.bf16.msra.mxu0 %v179
    %354 = vmatprep.subr.bf16.mxu0 %v227
    %355 = vmatpush1.bf16.msra.mxu0 %v224
    %356 = vmatprep.subr.bf16.mxu0 0
    %357 = vmatpush1.bf16.msra.mxu0 0
    %358 = vmatprep.subr.bf16.mxu0 0
    %359 = vmatpush1.bf16.msra.mxu0 0
    %360 = vmatprep.subr.bf16.mxu0 0
    %361 = vmatpush1.bf16.msra.mxu0 0
    %362 = vmatprep.subr.bf16.mxu0 0
    %363 = vmatpush1.bf16.msra.mxu0 0
    %364 = vmatprep.subr.bf16.mxu0 0
    %365 = vmatpush1.bf16.msra.mxu0 0
    %366 = vmatprep.subr.bf16.mxu0 0
    %367 = vmatpush1.bf16.msra.mxu0 0
    %368 = vmatprep.subr.bf16.mxu0 0
    %369 = vmatpush1.bf16.msra.mxu0 0
    %370 = vmatprep.subr.bf16.mxu0 0
    %371 = vmatpush1.bf16.msra.mxu0 0
    %372 = vmatprep.subr.bf16.mxu0 0
    %373 = vmatpush1.bf16.msra.mxu0 0
    %374 = vmatprep.subr.bf16.mxu0 0
    %375 = vmatpush1.bf16.msra.mxu0 0
    %376 = vmatprep.subr.bf16.mxu0 0
    %377 = vmatpush1.bf16.msra.mxu0 0
    %378 = vmatprep.subr.bf16.mxu0 0
    %379 = vmatpush1.bf16.msra.mxu0 0
    %380 = vmatprep.subr.bf16.mxu0 0
    %381 = vmatpush1.bf16.msra.mxu0 0
    %382 = vmatprep.subr.bf16.mxu0 0
    %383 = vmatpush1.bf16.msra.mxu0 0
    %384 = vmatprep.mubr.bf16.mxu0 0
    %385 = vmatmul.mubr.bf16.gmra.mrb[0].mxu0 %v199
    %v386 = vpop.f32.mrb[0].mxu0
    %v387 = vadd.f32 %v124, %v386
    %v388 = vpop.f32.mrb[0].mxu0
    %v389 = vadd.f32 %v128, %v388
    %v390 = vpop.f32.mrb[0].mxu0
    %v391 = vpop.f32.mrb[0].mxu0
    %392 = vdwg.mxu0
    %v393 = vmax.f32 %v264, 0.0
    %v394 = vmax.f32 %v266, 0.0
    %v395 = vmax.f32 %v305, 0.0
    %v396 = vmax.f32 %v307, 0.0
    %v397 = vmax.f32 %v346, 0.0
    %v398 = vmax.f32 %v348, 0.0
    %v399 = vmax.f32 %v387, 0.0
    %v400 = vmax.f32 %v389, 0.0
    %v401 = vpack.c.bf16 %v393, %v393
    %v402 = vpack.c.bf16 %v394, %v394
    %v403 = vpack.c.bf16 %v395, %v395
    %v404 = vpack.c.bf16 %v396, %v396
    %v405 = vpack.c.bf16 %v397, %v397
    %v406 = vpack.c.bf16 %v398, %v398
    %v407 = vpack.c.bf16 %v399, %v399
    %v408 = vpack.c.bf16 %v400, %v400
    %v409 = vld [vmem:[#allocation7] sm:$0xff]
    %v410 = vld [vmem:[#allocation7 + $0x8] sm:$0xf]
    %v411 = vld [vmem:[#allocation7 + $0xc] sm:$0xff]
    %v412 = vld [vmem:[#allocation7 + $0x14] sm:$0xf]
    %v413 = vld [vmem:[#allocation7 + $0x18] sm:$0xff]
    %v414 = vld [vmem:[#allocation7 + $0x20] sm:$0xf]
    %v415 = vld [vmem:[#allocation7 + $0x24] sm:$0xff]
    %v416 = vld [vmem:[#allocation7 + $0x2c] sm:$0xf]
    %v417 = vld [vmem:[#allocation7 + $0x30] sm:$0xff]
    %v418 = vld [vmem:[#allocation7 + $0x38] sm:$0xf]
    %v419 = vld [vmem:[#allocation7 + $0x3c] sm:$0xff]
    %v420 = vld [vmem:[#allocation7 + $0x44] sm:$0xf]
    %v421 = vld [vmem:[#allocation7 + $0x48] sm:$0xff]
    %v422 = vld [vmem:[#allocation7 + $0x50] sm:$0xf]
    %v423 = vld [vmem:[#allocation7 + $0x54] sm:$0xff]
    %v424 = vld [vmem:[#allocation7 + $0x5c] sm:$0xf]
    %v425 = vld [vmem:[#allocation7 + $0x60] sm:$0xff]
    %v426 = vld [vmem:[#allocation7 + $0x68] sm:$0xf]
    %v427 = vld [vmem:[#allocation7 + $0x6c] sm:$0xff]
    %v428 = vld [vmem:[#allocation7 + $0x74] sm:$0xf]
    %v429 = vld [vmem:[#allocation7 + $0x78] sm:$0xff]
    %v430 = vld [vmem:[#allocation7 + $0x80] sm:$0xf]
    %v431 = vld [vmem:[#allocation7 + $0x84] sm:$0xff]
    %v432 = vld [vmem:[#allocation7 + $0x8c] sm:$0xf]
    %v433 = vld [vmem:[#allocation7 + $0x90] sm:$0xff]
    %v434 = vld [vmem:[#allocation7 + $0x98] sm:$0xf]
    %v435 = vld [vmem:[#allocation7 + $0x9c] sm:$0xff]
    %v436 = vld [vmem:[#allocation7 + $0xa4] sm:$0xf]
    %v437 = vld [vmem:[#allocation7 + $0xa8] sm:$0xff]
    %v438 = vld [vmem:[#allocation7 + $0xb0] sm:$0xf]
    %v439 = vld [vmem:[#allocation7 + $0xb4] sm:$0xff]
    %v440 = vld [vmem:[#allocation7 + $0xbc] sm:$0xf]
    %v441 = vld [vmem:[#allocation7 + $0xc0] sm:$0xff]
    %v442 = vld [vmem:[#allocation7 + $0xc8] sm:$0xf]
    %v443 = vld [vmem:[#allocation7 + $0xcc] sm:$0xff]
    %v444 = vld [vmem:[#allocation7 + $0xd4] sm:$0xf]
    %v445 = vld [vmem:[#allocation7 + $0xd8] sm:$0xff]
    %v446 = vld [vmem:[#allocation7 + $0xe0] sm:$0xf]
    %v447 = vld [vmem:[#allocation7 + $0xe4] sm:$0xff]
    %v448 = vld [vmem:[#allocation7 + $0xec] sm:$0xf]
    %v449 = vld [vmem:[#allocation7 + $0xf0] sm:$0xff]
    %v450 = vld [vmem:[#allocation7 + $0xf8] sm:$0xf]
    %v451 = vld [vmem:[#allocation7 + $0xfc] sm:$0xff]
    %v452 = vld [vmem:[#allocation7 + $0x104] sm:$0xf]
    %v453 = vld [vmem:[#allocation7 + $0x108] sm:$0xff]
    %v454 = vld [vmem:[#allocation7 + $0x110] sm:$0xf]
    %v455 = vld [vmem:[#allocation7 + $0x114] sm:$0xff]
    %v456 = vld [vmem:[#allocation7 + $0x11c] sm:$0xf]
    %v457 = vld [vmem:[#allocation7 + $0x120] sm:$0xff]
    %v458 = vld [vmem:[#allocation7 + $0x128] sm:$0xf]
    %v459 = vld [vmem:[#allocation7 + $0x12c] sm:$0xff]
    %v460 = vld [vmem:[#allocation7 + $0x134] sm:$0xf]
    %v461 = vld [vmem:[#allocation7 + $0x138] sm:$0xff]
    %v462 = vld [vmem:[#allocation7 + $0x140] sm:$0xf]
    %v463 = vld [vmem:[#allocation7 + $0x144] sm:$0xff]
    %v464 = vld [vmem:[#allocation7 + $0x14c] sm:$0xf]
    %v465 = vld [vmem:[#allocation7 + $0x150] sm:$0xff]
    %v466 = vld [vmem:[#allocation7 + $0x158] sm:$0xf]
    %v467 = vld [vmem:[#allocation7 + $0x15c] sm:$0xff]
    %v468 = vld [vmem:[#allocation7 + $0x164] sm:$0xf]
    %v469 = vld [vmem:[#allocation7 + $0x168] sm:$0xff]
    %v470 = vld [vmem:[#allocation7 + $0x170] sm:$0xf]
    %v471 = vld [vmem:[#allocation7 + $0x174] sm:$0xff]
    %v472 = vld [vmem:[#allocation7 + $0x17c] sm:$0xf]
    %v473 = vld [vmem:[#allocation7 + $0x180] sm:$0xff]
    %v474 = vld [vmem:[#allocation7 + $0x188] sm:$0xf]
    %v475 = vld [vmem:[#allocation7 + $0x18c] sm:$0xff]
    %v476 = vld [vmem:[#allocation7 + $0x194] sm:$0xf]
    %v477 = vld [vmem:[#allocation7 + $0x198] sm:$0xff]
    %v478 = vld [vmem:[#allocation7 + $0x1a0] sm:$0xf]
    %v479 = vld [vmem:[#allocation7 + $0x1a4] sm:$0xff]
    %v480 = vld [vmem:[#allocation7 + $0x1ac] sm:$0xf]
    %v481 = vld [vmem:[#allocation7 + $0x1b0] sm:$0xff]
    %v482 = vld [vmem:[#allocation7 + $0x1b8] sm:$0xf]
    %v483 = vld [vmem:[#allocation7 + $0x1bc] sm:$0xff]
    %v484 = vld [vmem:[#allocation7 + $0x1c4] sm:$0xf]
    %v485 = vld [vmem:[#allocation7 + $0x1c8] sm:$0xff]
    %v486 = vld [vmem:[#allocation7 + $0x1d0] sm:$0xf]
    %v487 = vld [vmem:[#allocation7 + $0x1d4] sm:$0xff]
    %v488 = vld [vmem:[#allocation7 + $0x1dc] sm:$0xf]
    %v489 = vld [vmem:[#allocation7 + $0x1e0] sm:$0xff]
    %v490 = vld [vmem:[#allocation7 + $0x1e8] sm:$0xf]
    %v491 = vld [vmem:[#allocation7 + $0x1ec] sm:$0xff]
    %v492 = vld [vmem:[#allocation7 + $0x1f4] sm:$0xf]
    %v493 = vld [vmem:[#allocation7 + $0x1f8] sm:$0xff]
    %v494 = vld [vmem:[#allocation7 + $0x200] sm:$0xf]
    %v495 = vld [vmem:[#allocation7 + $0x204] sm:$0xff]
    %v496 = vld [vmem:[#allocation7 + $0x20c] sm:$0xf]
    %v497 = vld [vmem:[#allocation7 + $0x210] sm:$0xff]
    %v498 = vld [vmem:[#allocation7 + $0x218] sm:$0xf]
    %v499 = vld [vmem:[#allocation7 + $0x21c] sm:$0xff]
    %v500 = vld [vmem:[#allocation7 + $0x224] sm:$0xf]
    %v501 = vld [vmem:[#allocation7 + $0x228] sm:$0xff]
    %v502 = vld [vmem:[#allocation7 + $0x230] sm:$0xf]
    %v503 = vld [vmem:[#allocation7 + $0x234] sm:$0xff]
    %v504 = vld [vmem:[#allocation7 + $0x23c] sm:$0xf]
    %v505 = vld [vmem:[#allocation7 + $0x240] sm:$0xff]
    %v506 = vld [vmem:[#allocation7 + $0x248] sm:$0xf]
    %v507 = vld [vmem:[#allocation7 + $0x24c] sm:$0xff]
    %v508 = vld [vmem:[#allocation7 + $0x254] sm:$0xf]
    %v510 = vlaneseq
    %v511 = vshrl.u32 %v510, 7
    %v512 = vsub.s32 0, %v511
    %v513 = vrot.slane %v74, %v512
    %v514 = vlaneseq
    %v515 = vshrl.u32 %v514, 7
    %v516 = vsub.s32 1, %v515
    %v517 = vrot.slane %v74, %v516
    %v518 = vlaneseq
    %v519 = vshrl.u32 %v518, 7
    %v520 = vsub.s32 2, %v519
    %v521 = vrot.slane %v74, %v520
    %v625 = vunpack.c.l.b16 %v409
    %v626 = vunpack.c.h.b16 %v409
    %v627 = vunpack.c.l.b16 %v410
    %v628 = vunpack.c.l.b16 %v411
    %v629 = vunpack.c.h.b16 %v411
    %v630 = vunpack.c.l.b16 %v412
    %v631 = vunpack.c.l.b16 %v413
    %v632 = vunpack.c.h.b16 %v413
    %v633 = vunpack.c.l.b16 %v414
    %v634 = vunpack.c.l.b16 %v415
    %v635 = vunpack.c.h.b16 %v415
    %v636 = vunpack.c.l.b16 %v416
    %v637 = vunpack.c.l.b16 %v417
    %v638 = vunpack.c.h.b16 %v417
    %v639 = vunpack.c.l.b16 %v418
    %v640 = vunpack.c.l.b16 %v419
    %v641 = vunpack.c.h.b16 %v419
    %v642 = vunpack.c.l.b16 %v420
    %v643 = vunpack.c.l.b16 %v421
    %v644 = vunpack.c.h.b16 %v421
    %v645 = vunpack.c.l.b16 %v422
    %v646 = vunpack.c.l.b16 %v423
    %v647 = vunpack.c.h.b16 %v423
    %v648 = vunpack.c.l.b16 %v424
    %v649 = vunpack.c.l.b16 %v425
    %v650 = vunpack.c.h.b16 %v425
    %v651 = vunpack.c.l.b16 %v426
    %v652 = vunpack.c.l.b16 %v427
    %v653 = vunpack.c.h.b16 %v427
    %v654 = vunpack.c.l.b16 %v428
    %v655 = vunpack.c.l.b16 %v429
    %v656 = vunpack.c.h.b16 %v429
    %v657 = vunpack.c.l.b16 %v430
    %v658 = vunpack.c.l.b16 %v431
    %v659 = vunpack.c.h.b16 %v431
    %v660 = vunpack.c.l.b16 %v432
    %v661 = vunpack.c.l.b16 %v433
    %v662 = vunpack.c.h.b16 %v433
    %v663 = vunpack.c.l.b16 %v434
    %v664 = vunpack.c.l.b16 %v435
    %v665 = vunpack.c.h.b16 %v435
    %v666 = vunpack.c.l.b16 %v436
    %v667 = vunpack.c.l.b16 %v437
    %v668 = vunpack.c.h.b16 %v437
    %v669 = vunpack.c.l.b16 %v438
    %v670 = vunpack.c.l.b16 %v439
    %v671 = vunpack.c.h.b16 %v439
    %v672 = vunpack.c.l.b16 %v440
    %v673 = vunpack.c.l.b16 %v441
    %v674 = vunpack.c.h.b16 %v441
    %v675 = vunpack.c.l.b16 %v442
    %v676 = vunpack.c.l.b16 %v443
    %v677 = vunpack.c.h.b16 %v443
    %v678 = vunpack.c.l.b16 %v444
    %v679 = vunpack.c.l.b16 %v445
    %v680 = vunpack.c.h.b16 %v445
    %v681 = vunpack.c.l.b16 %v446
    %v682 = vunpack.c.l.b16 %v447
    %v683 = vunpack.c.h.b16 %v447
    %v684 = vunpack.c.l.b16 %v448
    %v685 = vunpack.c.l.b16 %v449
    %v686 = vunpack.c.h.b16 %v449
    %v687 = vunpack.c.l.b16 %v450
    %v688 = vunpack.c.l.b16 %v451
    %v689 = vunpack.c.h.b16 %v451
    %v690 = vunpack.c.l.b16 %v452
    %v691 = vunpack.c.l.b16 %v453
    %v692 = vunpack.c.h.b16 %v453
    %v693 = vunpack.c.l.b16 %v454
    %v694 = vunpack.c.l.b16 %v455
    %v695 = vunpack.c.h.b16 %v455
    %v696 = vunpack.c.l.b16 %v456
    %v697 = vunpack.c.l.b16 %v457
    %v698 = vunpack.c.h.b16 %v457
    %v699 = vunpack.c.l.b16 %v458
    %v700 = vunpack.c.l.b16 %v459
    %v701 = vunpack.c.h.b16 %v459
    %v702 = vunpack.c.l.b16 %v460
    %v703 = vunpack.c.l.b16 %v461
    %v704 = vunpack.c.h.b16 %v461
    %v705 = vunpack.c.l.b16 %v462
    %v706 = vunpack.c.l.b16 %v463
    %v707 = vunpack.c.h.b16 %v463
    %v708 = vunpack.c.l.b16 %v464
    %v709 = vunpack.c.l.b16 %v465
    %v710 = vunpack.c.h.b16 %v465
    %v711 = vunpack.c.l.b16 %v466
    %v712 = vunpack.c.l.b16 %v467
    %v713 = vunpack.c.h.b16 %v467
    %v714 = vunpack.c.l.b16 %v468
    %v715 = vunpack.c.l.b16 %v469
    %v716 = vunpack.c.h.b16 %v469
    %v717 = vunpack.c.l.b16 %v470
    %v718 = vunpack.c.l.b16 %v471
    %v719 = vunpack.c.h.b16 %v471
    %v720 = vunpack.c.l.b16 %v472
    %v721 = vunpack.c.l.b16 %v473
    %v722 = vunpack.c.h.b16 %v473
    %v723 = vunpack.c.l.b16 %v474
    %v724 = vunpack.c.l.b16 %v475
    %v725 = vunpack.c.h.b16 %v475
    %v726 = vunpack.c.l.b16 %v476
    %v727 = vunpack.c.l.b16 %v477
    %v728 = vunpack.c.h.b16 %v477
    %v729 = vunpack.c.l.b16 %v478
    %v730 = vunpack.c.l.b16 %v479
    %v731 = vunpack.c.h.b16 %v479
    %v732 = vunpack.c.l.b16 %v480
    %v733 = vunpack.c.l.b16 %v481
    %v734 = vunpack.c.h.b16 %v481
    %v735 = vunpack.c.l.b16 %v482
    %v736 = vunpack.c.l.b16 %v483
    %v737 = vunpack.c.h.b16 %v483
    %v738 = vunpack.c.l.b16 %v484
    %v739 = vunpack.c.l.b16 %v485
    %v740 = vunpack.c.h.b16 %v485
    %v741 = vunpack.c.l.b16 %v486
    %v742 = vunpack.c.l.b16 %v487
    %v743 = vunpack.c.h.b16 %v487
    %v744 = vunpack.c.l.b16 %v488
    %v745 = vunpack.c.l.b16 %v489
    %v746 = vunpack.c.h.b16 %v489
    %v747 = vunpack.c.l.b16 %v490
    %v748 = vunpack.c.l.b16 %v491
    %v749 = vunpack.c.h.b16 %v491
    %v750 = vunpack.c.l.b16 %v492
    %v751 = vunpack.c.l.b16 %v493
    %v752 = vunpack.c.h.b16 %v493
    %v753 = vunpack.c.l.b16 %v494
    %v754 = vunpack.c.l.b16 %v495
    %v755 = vunpack.c.h.b16 %v495
    %v756 = vunpack.c.l.b16 %v496
    %v757 = vunpack.c.l.b16 %v497
    %v758 = vunpack.c.h.b16 %v497
    %v759 = vunpack.c.l.b16 %v498
    %v760 = vunpack.c.l.b16 %v499
    %v761 = vunpack.c.h.b16 %v499
    %v762 = vunpack.c.l.b16 %v500
    %v763 = vunpack.c.l.b16 %v501
    %v764 = vunpack.c.h.b16 %v501
    %v765 = vunpack.c.l.b16 %v502
    %v766 = vunpack.c.l.b16 %v503
    %v767 = vunpack.c.h.b16 %v503
    %v768 = vunpack.c.l.b16 %v504
    %v769 = vunpack.c.l.b16 %v505
    %v770 = vunpack.c.h.b16 %v505
    %v771 = vunpack.c.l.b16 %v506
    %v772 = vunpack.c.l.b16 %v507
    %v773 = vunpack.c.h.b16 %v507
    %v774 = vunpack.c.l.b16 %v508
    %v775 = vpack.c.b16 %v628, %v625
    %v776 = vpack.c.b16 %v629, %v626
    %v777 = vpack.c.b16 %v630, %v627
    %v778 = vpack.c.b16 %v634, %v631
    %v779 = vpack.c.b16 %v635, %v632
    %v780 = vpack.c.b16 %v636, %v633
    %v781 = vpack.c.b16 %v640, %v637
    %v782 = vpack.c.b16 %v641, %v638
    %v783 = vpack.c.b16 %v642, %v639
    %v784 = vpack.c.b16 %v646, %v643
    %v785 = vpack.c.b16 %v647, %v644
    %v786 = vpack.c.b16 %v648, %v645
    %v787 = vpack.c.b16 %v652, %v649
    %v788 = vpack.c.b16 %v653, %v650
    %v789 = vpack.c.b16 %v654, %v651
    %v790 = vpack.c.b16 %v658, %v655
    %v791 = vpack.c.b16 %v659, %v656
    %v792 = vpack.c.b16 %v660, %v657
    %v793 = vpack.c.b16 %v664, %v661
    %v794 = vpack.c.b16 %v665, %v662
    %v795 = vpack.c.b16 %v666, %v663
    %v796 = vpack.c.b16 %v670, %v667
    %v797 = vpack.c.b16 %v671, %v668
    %v798 = vpack.c.b16 %v672, %v669
    %v799 = vpack.c.b16 %v676, %v673
    %v800 = vpack.c.b16 %v677, %v674
    %v801 = vpack.c.b16 %v678, %v675
    %v802 = vpack.c.b16 %v682, %v679
    %v803 = vpack.c.b16 %v683, %v680
    %v804 = vpack.c.b16 %v684, %v681
    %v805 = vpack.c.b16 %v688, %v685
    %v806 = vpack.c.b16 %v689, %v686
    %v807 = vpack.c.b16 %v690, %v687
    %v808 = vpack.c.b16 %v694, %v691
    %v809 = vpack.c.b16 %v695, %v692
    %v810 = vpack.c.b16 %v696, %v693
    %v811 = vpack.c.b16 %v700, %v697
    %v812 = vpack.c.b16 %v701, %v698
    %v813 = vpack.c.b16 %v702, %v699
    %v814 = vpack.c.b16 %v706, %v703
    %v815 = vpack.c.b16 %v707, %v704
    %v816 = vpack.c.b16 %v708, %v705
    %v817 = vpack.c.b16 %v712, %v709
    %v818 = vpack.c.b16 %v713, %v710
    %v819 = vpack.c.b16 %v714, %v711
    %v820 = vpack.c.b16 %v718, %v715
    %v821 = vpack.c.b16 %v719, %v716
    %v822 = vpack.c.b16 %v720, %v717
    %v823 = vpack.c.b16 %v724, %v721
    %v824 = vpack.c.b16 %v725, %v722
    %v825 = vpack.c.b16 %v726, %v723
    %v826 = vpack.c.b16 %v730, %v727
    %v827 = vpack.c.b16 %v731, %v728
    %v828 = vpack.c.b16 %v732, %v729
    %v829 = vpack.c.b16 %v736, %v733
    %v830 = vpack.c.b16 %v737, %v734
    %v831 = vpack.c.b16 %v738, %v735
    %v832 = vpack.c.b16 %v742, %v739
    %v833 = vpack.c.b16 %v743, %v740
    %v834 = vpack.c.b16 %v744, %v741
    %v835 = vpack.c.b16 %v748, %v745
    %v836 = vpack.c.b16 %v749, %v746
    %v837 = vpack.c.b16 %v750, %v747
    %v838 = vpack.c.b16 %v754, %v751
    %v839 = vpack.c.b16 %v755, %v752
    %v840 = vpack.c.b16 %v756, %v753
    %v841 = vpack.c.b16 %v760, %v757
    %v842 = vpack.c.b16 %v761, %v758
    %v843 = vpack.c.b16 %v762, %v759
    %v844 = vpack.c.b16 %v766, %v763
    %v845 = vpack.c.b16 %v767, %v764
    %v846 = vpack.c.b16 %v768, %v765
    %v847 = vpack.c.b16 %v772, %v769
    %v848 = vpack.c.b16 %v773, %v770
    %v849 = vpack.c.b16 %v774, %v771
    %vm925 = vcmask 130048
    %v927 = vsel %vm925, %v404, 0
    %929 = vmatprep.subr.bf16.mxu0 %v776
    %930 = vmatpush1.bf16.msra.mxu0 %v775
    %931 = vmatprep.subr.bf16.mxu0 %v779
    %932 = vmatpush1.bf16.msra.mxu0 %v778
    %933 = vmatprep.subr.bf16.mxu0 %v782
    %934 = vmatpush1.bf16.msra.mxu0 %v781
    %935 = vmatprep.subr.bf16.mxu0 %v785
    %936 = vmatpush1.bf16.msra.mxu0 %v784
    %937 = vmatprep.subr.bf16.mxu0 %v788
    %938 = vmatpush1.bf16.msra.mxu0 %v787
    %939 = vmatprep.subr.bf16.mxu0 %v791
    %940 = vmatpush1.bf16.msra.mxu0 %v790
    %941 = vmatprep.subr.bf16.mxu0 %v794
    %942 = vmatpush1.bf16.msra.mxu0 %v793
    %943 = vmatprep.subr.bf16.mxu0 %v797
    %944 = vmatpush1.bf16.msra.mxu0 %v796
    %945 = vmatprep.subr.bf16.mxu0 %v800
    %946 = vmatpush1.bf16.msra.mxu0 %v799
    %947 = vmatprep.subr.bf16.mxu0 %v803
    %948 = vmatpush1.bf16.msra.mxu0 %v802
    %949 = vmatprep.subr.bf16.mxu0 %v806
    %950 = vmatpush1.bf16.msra.mxu0 %v805
    %951 = vmatprep.subr.bf16.mxu0 %v809
    %952 = vmatpush1.bf16.msra.mxu0 %v808
    %953 = vmatprep.subr.bf16.mxu0 %v812
    %954 = vmatpush1.bf16.msra.mxu0 %v811
    %955 = vmatprep.subr.bf16.mxu0 %v815
    %956 = vmatpush1.bf16.msra.mxu0 %v814
    %957 = vmatprep.subr.bf16.mxu0 %v818
    %958 = vmatpush1.bf16.msra.mxu0 %v817
    %959 = vmatprep.subr.bf16.mxu0 %v821
    %960 = vmatpush1.bf16.msra.mxu0 %v820
    %961 = vmatprep.mubr.bf16.mxu0 %v402
    %962 = vmatmul.mubr.bf16.gmra.mrb[0].mxu0 %v401
    %v963 = vpop.f32.mrb[0].mxu0
    %v964 = vadd.f32 %v513, %v963
    %v965 = vpop.f32.mrb[0].mxu0
    %v966 = vadd.f32 %v517, %v965
    %v967 = vpop.f32.mrb[0].mxu0
    %v968 = vpop.f32.mrb[0].mxu0
    %969 = vdwg.mxu0
    %970 = vmatprep.subr.bf16.mxu0 %v824
    %971 = vmatpush1.bf16.msra.mxu0 %v823
    %972 = vmatprep.subr.bf16.mxu0 %v827
    %973 = vmatpush1.bf16.msra.mxu0 %v826
    %974 = vmatprep.subr.bf16.mxu0 %v830
    %975 = vmatpush1.bf16.msra.mxu0 %v829
    %976 = vmatprep.subr.bf16.mxu0 %v833
    %977 = vmatpush1.bf16.msra.mxu0 %v832
    %978 = vmatprep.subr.bf16.mxu0 %v836
    %979 = vmatpush1.bf16.msra.mxu0 %v835
    %980 = vmatprep.subr.bf16.mxu0 %v839
    %981 = vmatpush1.bf16.msra.mxu0 %v838
    %982 = vmatprep.subr.bf16.mxu0 %v842
    %983 = vmatpush1.bf16.msra.mxu0 %v841
    %984 = vmatprep.subr.bf16.mxu0 %v845
    %985 = vmatpush1.bf16.msra.mxu0 %v844
    %986 = vmatprep.subr.bf16.mxu0 %v848
    %987 = vmatpush1.bf16.msra.mxu0 %v847
    %988 = vmatprep.subr.bf16.mxu0 0
    %989 = vmatpush1.bf16.msra.mxu0 0
    %990 = vmatprep.subr.bf16.mxu0 0
    %991 = vmatpush1.bf16.msra.mxu0 0
    %992 = vmatprep.subr.bf16.mxu0 0
    %993 = vmatpush1.bf16.msra.mxu0 0
    %994 = vmatprep.subr.bf16.mxu0 0
    %995 = vmatpush1.bf16.msra.mxu0 0
    %996 = vmatprep.subr.bf16.mxu0 0
    %997 = vmatpush1.bf16.msra.mxu0 0
    %998 = vmatprep.subr.bf16.mxu0 0
    %999 = vmatpush1.bf16.msra.mxu0 0
    %1000 = vmatprep.subr.bf16.mxu0 0
    %1001 = vmatpush1.bf16.msra.mxu0 0
    %1002 = vmatprep.mubr.bf16.mxu0 %v927
    %1003 = vmatmul.mubr.bf16.gmra.mrb[0].mxu0 %v403
    %v1004 = vpop.f32.mrb[0].mxu0
    %v1005 = vadd.f32 %v964, %v1004
    %v1006 = vpop.f32.mrb[0].mxu0
    %v1007 = vadd.f32 %v966, %v1006
    %v1008 = vpop.f32.mrb[0].mxu0
    %v1009 = vpop.f32.mrb[0].mxu0
    %1010 = vdwg.mxu0
    %1011 = vmatprep.subr.bf16.mxu0 0
    %1012 = vmatpush1.bf16.msra.mxu0 %v777
    %1013 = vmatprep.subr.bf16.mxu0 0
    %1014 = vmatpush1.bf16.msra.mxu0 %v780
    %1015 = vmatprep.subr.bf16.mxu0 0
    %1016 = vmatpush1.bf16.msra.mxu0 %v783
    %1017 = vmatprep.subr.bf16.mxu0 0
    %1018 = vmatpush1.bf16.msra.mxu0 %v786
    %1019 = vmatprep.subr.bf16.mxu0 0
    %1020 = vmatpush1.bf16.msra.mxu0 %v789
    %1021 = vmatprep.subr.bf16.mxu0 0
    %1022 = vmatpush1.bf16.msra.mxu0 %v792
    %1023 = vmatprep.subr.bf16.mxu0 0
    %1024 = vmatpush1.bf16.msra.mxu0 %v795
    %1025 = vmatprep.subr.bf16.mxu0 0
    %1026 = vmatpush1.bf16.msra.mxu0 %v798
    %1027 = vmatprep.subr.bf16.mxu0 0
    %1028 = vmatpush1.bf16.msra.mxu0 %v801
    %1029 = vmatprep.subr.bf16.mxu0 0
    %1030 = vmatpush1.bf16.msra.mxu0 %v804
    %1031 = vmatprep.subr.bf16.mxu0 0
    %1032 = vmatpush1.bf16.msra.mxu0 %v807
    %1033 = vmatprep.subr.bf16.mxu0 0
    %1034 = vmatpush1.bf16.msra.mxu0 %v810
    %1035 = vmatprep.subr.bf16.mxu0 0
    %1036 = vmatpush1.bf16.msra.mxu0 %v813
    %1037 = vmatprep.subr.bf16.mxu0 0
    %1038 = vmatpush1.bf16.msra.mxu0 %v816
    %1039 = vmatprep.subr.bf16.mxu0 0
    %1040 = vmatpush1.bf16.msra.mxu0 %v819
    %1041 = vmatprep.subr.bf16.mxu0 0
    %1042 = vmatpush1.bf16.msra.mxu0 %v822
    %1043 = vmatprep.mubr.bf16.mxu0 %v402
    %1044 = vmatmul.mubr.bf16.gmra.mrb[0].mxu0 %v401
    %v1045 = vpop.f32.mrb[0].mxu0
    %v1046 = vadd.f32 %v521, %v1045
    %v1047 = vpop.f32.mrb[0].mxu0
    %v1048 = vpop.f32.mrb[0].mxu0
    %v1049 = vpop.f32.mrb[0].mxu0
    %1050 = vdwg.mxu0
    %1051 = vmatprep.subr.bf16.mxu0 0
    %1052 = vmatpush1.bf16.msra.mxu0 %v825
    %1053 = vmatprep.subr.bf16.mxu0 0
    %1054 = vmatpush1.bf16.msra.mxu0 %v828
    %1055 = vmatprep.subr.bf16.mxu0 0
    %1056 = vmatpush1.bf16.msra.mxu0 %v831
    %1057 = vmatprep.subr.bf16.mxu0 0
    %1058 = vmatpush1.bf16.msra.mxu0 %v834
    %1059 = vmatprep.subr.bf16.mxu0 0
    %1060 = vmatpush1.bf16.msra.mxu0 %v837
    %1061 = vmatprep.subr.bf16.mxu0 0
    %1062 = vmatpush1.bf16.msra.mxu0 %v840
    %1063 = vmatprep.subr.bf16.mxu0 0
    %1064 = vmatpush1.bf16.msra.mxu0 %v843
    %1065 = vmatprep.subr.bf16.mxu0 0
    %1066 = vmatpush1.bf16.msra.mxu0 %v846
    %1067 = vmatprep.subr.bf16.mxu0 0
    %1068 = vmatpush1.bf16.msra.mxu0 %v849
    %1069 = vmatprep.subr.bf16.mxu0 0
    %1070 = vmatpush1.bf16.msra.mxu0 0
    %1071 = vmatprep.subr.bf16.mxu0 0
    %1072 = vmatpush1.bf16.msra.mxu0 0
    %1073 = vmatprep.subr.bf16.mxu0 0
    %1074 = vmatpush1.bf16.msra.mxu0 0
    %1075 = vmatprep.subr.bf16.mxu0 0
    %1076 = vmatpush1.bf16.msra.mxu0 0
    %1077 = vmatprep.subr.bf16.mxu0 0
    %1078 = vmatpush1.bf16.msra.mxu0 0
    %1079 = vmatprep.subr.bf16.mxu0 0
    %1080 = vmatpush1.bf16.msra.mxu0 0
    %1081 = vmatprep.subr.bf16.mxu0 0
    %1082 = vmatpush1.bf16.msra.mxu0 0
    %1083 = vmatprep.mubr.bf16.mxu0 %v927
    %1084 = vmatmul.mubr.bf16.gmra.mrb[0].mxu0 %v403
    %v1085 = vpop.f32.mrb[0].mxu0
    %v1086 = vadd.f32 %v1046, %v1085
    %v1087 = vpop.f32.mrb[0].mxu0
    %v1088 = vpop.f32.mrb[0].mxu0
    %v1089 = vpop.f32.mrb[0].mxu0
    %1090 = vdwg.mxu0
    %v1091 = vmax.f32 %v1005, 0.0
    %v1092 = vmax.f32 %v1007, 0.0
    %v1093 = vmax.f32 %v1086, 0.0
    %s1094 = scalar_lea.vmem [#allocation7], 600
    %v1095 = vld [vmem:[%s1094] sm:$0xff]
    %v1096 = vld [vmem:[%s1094 + $0x8] sm:$0xf]
    %v1097 = vld [vmem:[%s1094 + $0xc] sm:$0xff]
    %v1098 = vld [vmem:[%s1094 + $0x14] sm:$0xf]
    %v1099 = vld [vmem:[%s1094 + $0x18] sm:$0xff]
    %v1100 = vld [vmem:[%s1094 + $0x20] sm:$0xf]
    %v1101 = vld [vmem:[%s1094 + $0x24] sm:$0xff]
    %v1102 = vld [vmem:[%s1094 + $0x2c] sm:$0xf]
    %v1103 = vld [vmem:[%s1094 + $0x30] sm:$0xff]
    %v1104 = vld [vmem:[%s1094 + $0x38] sm:$0xf]
    %v1105 = vld [vmem:[%s1094 + $0x3c] sm:$0xff]
    %v1106 = vld [vmem:[%s1094 + $0x44] sm:$0xf]
    %v1107 = vld [vmem:[%s1094 + $0x48] sm:$0xff]
    %v1108 = vld [vmem:[%s1094 + $0x50] sm:$0xf]
    %v1109 = vld [vmem:[%s1094 + $0x54] sm:$0xff]
    %v1110 = vld [vmem:[%s1094 + $0x5c] sm:$0xf]
    %v1111 = vld [vmem:[%s1094 + $0x60] sm:$0xff]
    %v1112 = vld [vmem:[%s1094 + $0x68] sm:$0xf]
    %v1113 = vld [vmem:[%s1094 + $0x6c] sm:$0xff]
    %v1114 = vld [vmem:[%s1094 + $0x74] sm:$0xf]
    %v1115 = vld [vmem:[%s1094 + $0x78] sm:$0xff]
    %v1116 = vld [vmem:[%s1094 + $0x80] sm:$0xf]
    %v1117 = vld [vmem:[%s1094 + $0x84] sm:$0xff]
    %v1118 = vld [vmem:[%s1094 + $0x8c] sm:$0xf]
    %v1119 = vld [vmem:[%s1094 + $0x90] sm:$0xff]
    %v1120 = vld [vmem:[%s1094 + $0x98] sm:$0xf]
    %v1121 = vld [vmem:[%s1094 + $0x9c] sm:$0xff]
    %v1122 = vld [vmem:[%s1094 + $0xa4] sm:$0xf]
    %v1123 = vld [vmem:[%s1094 + $0xa8] sm:$0xff]
    %v1124 = vld [vmem:[%s1094 + $0xb0] sm:$0xf]
    %v1125 = vld [vmem:[%s1094 + $0xb4] sm:$0xff]
    %v1126 = vld [vmem:[%s1094 + $0xbc] sm:$0xf]
    %v1127 = vld [vmem:[%s1094 + $0xc0] sm:$0xff]
    %v1128 = vld [vmem:[%s1094 + $0xc8] sm:$0xf]
    %v1129 = vld [vmem:[%s1094 + $0xcc] sm:$0xff]
    %v1130 = vld [vmem:[%s1094 + $0xd4] sm:$0xf]
    %v1131 = vld [vmem:[%s1094 + $0xd8] sm:$0xff]
    %v1132 = vld [vmem:[%s1094 + $0xe0] sm:$0xf]
    %v1133 = vld [vmem:[%s1094 + $0xe4] sm:$0xff]
    %v1134 = vld [vmem:[%s1094 + $0xec] sm:$0xf]
    %v1135 = vld [vmem:[%s1094 + $0xf0] sm:$0xff]
    %v1136 = vld [vmem:[%s1094 + $0xf8] sm:$0xf]
    %v1137 = vld [vmem:[%s1094 + $0xfc] sm:$0xff]
    %v1138 = vld [vmem:[%s1094 + $0x104] sm:$0xf]
    %v1139 = vld [vmem:[%s1094 + $0x108] sm:$0xff]
    %v1140 = vld [vmem:[%s1094 + $0x110] sm:$0xf]
    %v1141 = vld [vmem:[%s1094 + $0x114] sm:$0xff]
    %v1142 = vld [vmem:[%s1094 + $0x11c] sm:$0xf]
    %v1143 = vld [vmem:[%s1094 + $0x120] sm:$0xff]
    %v1144 = vld [vmem:[%s1094 + $0x128] sm:$0xf]
    %v1145 = vld [vmem:[%s1094 + $0x12c] sm:$0xff]
    %v1146 = vld [vmem:[%s1094 + $0x134] sm:$0xf]
    %v1147 = vld [vmem:[%s1094 + $0x138] sm:$0xff]
    %v1148 = vld [vmem:[%s1094 + $0x140] sm:$0xf]
    %v1149 = vld [vmem:[%s1094 + $0x144] sm:$0xff]
    %v1150 = vld [vmem:[%s1094 + $0x14c] sm:$0xf]
    %v1151 = vld [vmem:[%s1094 + $0x150] sm:$0xff]
    %v1152 = vld [vmem:[%s1094 + $0x158] sm:$0xf]
    %v1153 = vld [vmem:[%s1094 + $0x15c] sm:$0xff]
    %v1154 = vld [vmem:[%s1094 + $0x164] sm:$0xf]
    %v1155 = vld [vmem:[%s1094 + $0x168] sm:$0xff]
    %v1156 = vld [vmem:[%s1094 + $0x170] sm:$0xf]
    %v1157 = vld [vmem:[%s1094 + $0x174] sm:$0xff]
    %v1158 = vld [vmem:[%s1094 + $0x17c] sm:$0xf]
    %v1159 = vld [vmem:[%s1094 + $0x180] sm:$0xff]
    %v1160 = vld [vmem:[%s1094 + $0x188] sm:$0xf]
    %v1161 = vld [vmem:[%s1094 + $0x18c] sm:$0xff]
    %v1162 = vld [vmem:[%s1094 + $0x194] sm:$0xf]
    %v1163 = vld [vmem:[%s1094 + $0x198] sm:$0xff]
    %v1164 = vld [vmem:[%s1094 + $0x1a0] sm:$0xf]
    %v1165 = vld [vmem:[%s1094 + $0x1a4] sm:$0xff]
    %v1166 = vld [vmem:[%s1094 + $0x1ac] sm:$0xf]
    %v1167 = vld [vmem:[%s1094 + $0x1b0] sm:$0xff]
    %v1168 = vld [vmem:[%s1094 + $0x1b8] sm:$0xf]
    %v1169 = vld [vmem:[%s1094 + $0x1bc] sm:$0xff]
    %v1170 = vld [vmem:[%s1094 + $0x1c4] sm:$0xf]
    %v1171 = vld [vmem:[%s1094 + $0x1c8] sm:$0xff]
    %v1172 = vld [vmem:[%s1094 + $0x1d0] sm:$0xf]
    %v1173 = vld [vmem:[%s1094 + $0x1d4] sm:$0xff]
    %v1174 = vld [vmem:[%s1094 + $0x1dc] sm:$0xf]
    %v1175 = vld [vmem:[%s1094 + $0x1e0] sm:$0xff]
    %v1176 = vld [vmem:[%s1094 + $0x1e8] sm:$0xf]
    %v1177 = vld [vmem:[%s1094 + $0x1ec] sm:$0xff]
    %v1178 = vld [vmem:[%s1094 + $0x1f4] sm:$0xf]
    %v1179 = vld [vmem:[%s1094 + $0x1f8] sm:$0xff]
    %v1180 = vld [vmem:[%s1094 + $0x200] sm:$0xf]
    %v1181 = vld [vmem:[%s1094 + $0x204] sm:$0xff]
    %v1182 = vld [vmem:[%s1094 + $0x20c] sm:$0xf]
    %v1183 = vld [vmem:[%s1094 + $0x210] sm:$0xff]
    %v1184 = vld [vmem:[%s1094 + $0x218] sm:$0xf]
    %v1185 = vld [vmem:[%s1094 + $0x21c] sm:$0xff]
    %v1186 = vld [vmem:[%s1094 + $0x224] sm:$0xf]
    %v1187 = vld [vmem:[%s1094 + $0x228] sm:$0xff]
    %v1188 = vld [vmem:[%s1094 + $0x230] sm:$0xf]
    %v1189 = vld [vmem:[%s1094 + $0x234] sm:$0xff]
    %v1190 = vld [vmem:[%s1094 + $0x23c] sm:$0xf]
    %v1191 = vld [vmem:[%s1094 + $0x240] sm:$0xff]
    %v1192 = vld [vmem:[%s1094 + $0x248] sm:$0xf]
    %v1193 = vld [vmem:[%s1094 + $0x24c] sm:$0xff]
    %v1194 = vld [vmem:[%s1094 + $0x254] sm:$0xf]
    %v1196 = vlaneseq
    %v1197 = vshrl.u32 %v1196, 7
    %v1198 = vsub.s32 0, %v1197
    %v1199 = vrot.slane %v76, %v1198
    %v1200 = vlaneseq
    %v1201 = vshrl.u32 %v1200, 7
    %v1202 = vsub.s32 1, %v1201
    %v1203 = vrot.slane %v76, %v1202
    %v1204 = vlaneseq
    %v1205 = vshrl.u32 %v1204, 7
    %v1206 = vsub.s32 2, %v1205
    %v1207 = vrot.slane %v76, %v1206
    %v1311 = vunpack.c.l.b16 %v1095
    %v1312 = vunpack.c.h.b16 %v1095
    %v1313 = vunpack.c.l.b16 %v1096
    %v1314 = vunpack.c.l.b16 %v1097
    %v1315 = vunpack.c.h.b16 %v1097
    %v1316 = vunpack.c.l.b16 %v1098
    %v1317 = vunpack.c.l.b16 %v1099
    %v1318 = vunpack.c.h.b16 %v1099
    %v1319 = vunpack.c.l.b16 %v1100
    %v1320 = vunpack.c.l.b16 %v1101
    %v1321 = vunpack.c.h.b16 %v1101
    %v1322 = vunpack.c.l.b16 %v1102
    %v1323 = vunpack.c.l.b16 %v1103
    %v1324 = vunpack.c.h.b16 %v1103
    %v1325 = vunpack.c.l.b16 %v1104
    %v1326 = vunpack.c.l.b16 %v1105
    %v1327 = vunpack.c.h.b16 %v1105
    %v1328 = vunpack.c.l.b16 %v1106
    %v1329 = vunpack.c.l.b16 %v1107
    %v1330 = vunpack.c.h.b16 %v1107
    %v1331 = vunpack.c.l.b16 %v1108
    %v1332 = vunpack.c.l.b16 %v1109
    %v1333 = vunpack.c.h.b16 %v1109
    %v1334 = vunpack.c.l.b16 %v1110
    %v1335 = vunpack.c.l.b16 %v1111
    %v1336 = vunpack.c.h.b16 %v1111
    %v1337 = vunpack.c.l.b16 %v1112
    %v1338 = vunpack.c.l.b16 %v1113
    %v1339 = vunpack.c.h.b16 %v1113
    %v1340 = vunpack.c.l.b16 %v1114
    %v1341 = vunpack.c.l.b16 %v1115
    %v1342 = vunpack.c.h.b16 %v1115
    %v1343 = vunpack.c.l.b16 %v1116
    %v1344 = vunpack.c.l.b16 %v1117
    %v1345 = vunpack.c.h.b16 %v1117
    %v1346 = vunpack.c.l.b16 %v1118
    %v1347 = vunpack.c.l.b16 %v1119
    %v1348 = vunpack.c.h.b16 %v1119
    %v1349 = vunpack.c.l.b16 %v1120
    %v1350 = vunpack.c.l.b16 %v1121
    %v1351 = vunpack.c.h.b16 %v1121
    %v1352 = vunpack.c.l.b16 %v1122
    %v1353 = vunpack.c.l.b16 %v1123
    %v1354 = vunpack.c.h.b16 %v1123
    %v1355 = vunpack.c.l.b16 %v1124
    %v1356 = vunpack.c.l.b16 %v1125
    %v1357 = vunpack.c.h.b16 %v1125
    %v1358 = vunpack.c.l.b16 %v1126
    %v1359 = vunpack.c.l.b16 %v1127
    %v1360 = vunpack.c.h.b16 %v1127
    %v1361 = vunpack.c.l.b16 %v1128
    %v1362 = vunpack.c.l.b16 %v1129
    %v1363 = vunpack.c.h.b16 %v1129
    %v1364 = vunpack.c.l.b16 %v1130
    %v1365 = vunpack.c.l.b16 %v1131
    %v1366 = vunpack.c.h.b16 %v1131
    %v1367 = vunpack.c.l.b16 %v1132
    %v1368 = vunpack.c.l.b16 %v1133
    %v1369 = vunpack.c.h.b16 %v1133
    %v1370 = vunpack.c.l.b16 %v1134
    %v1371 = vunpack.c.l.b16 %v1135
    %v1372 = vunpack.c.h.b16 %v1135
    %v1373 = vunpack.c.l.b16 %v1136
    %v1374 = vunpack.c.l.b16 %v1137
    %v1375 = vunpack.c.h.b16 %v1137
    %v1376 = vunpack.c.l.b16 %v1138
    %v1377 = vunpack.c.l.b16 %v1139
    %v1378 = vunpack.c.h.b16 %v1139
    %v1379 = vunpack.c.l.b16 %v1140
    %v1380 = vunpack.c.l.b16 %v1141
    %v1381 = vunpack.c.h.b16 %v1141
    %v1382 = vunpack.c.l.b16 %v1142
    %v1383 = vunpack.c.l.b16 %v1143
    %v1384 = vunpack.c.h.b16 %v1143
    %v1385 = vunpack.c.l.b16 %v1144
    %v1386 = vunpack.c.l.b16 %v1145
    %v1387 = vunpack.c.h.b16 %v1145
    %v1388 = vunpack.c.l.b16 %v1146
    %v1389 = vunpack.c.l.b16 %v1147
    %v1390 = vunpack.c.h.b16 %v1147
    %v1391 = vunpack.c.l.b16 %v1148
    %v1392 = vunpack.c.l.b16 %v1149
    %v1393 = vunpack.c.h.b16 %v1149
    %v1394 = vunpack.c.l.b16 %v1150
    %v1395 = vunpack.c.l.b16 %v1151
    %v1396 = vunpack.c.h.b16 %v1151
    %v1397 = vunpack.c.l.b16 %v1152
    %v1398 = vunpack.c.l.b16 %v1153
    %v1399 = vunpack.c.h.b16 %v1153
    %v1400 = vunpack.c.l.b16 %v1154
    %v1401 = vunpack.c.l.b16 %v1155
    %v1402 = vunpack.c.h.b16 %v1155
    %v1403 = vunpack.c.l.b16 %v1156
    %v1404 = vunpack.c.l.b16 %v1157
    %v1405 = vunpack.c.h.b16 %v1157
    %v1406 = vunpack.c.l.b16 %v1158
    %v1407 = vunpack.c.l.b16 %v1159
    %v1408 = vunpack.c.h.b16 %v1159
    %v1409 = vunpack.c.l.b16 %v1160
    %v1410 = vunpack.c.l.b16 %v1161
    %v1411 = vunpack.c.h.b16 %v1161
    %v1412 = vunpack.c.l.b16 %v1162
    %v1413 = vunpack.c.l.b16 %v1163
    %v1414 = vunpack.c.h.b16 %v1163
    %v1415 = vunpack.c.l.b16 %v1164
    %v1416 = vunpack.c.l.b16 %v1165
    %v1417 = vunpack.c.h.b16 %v1165
    %v1418 = vunpack.c.l.b16 %v1166
    %v1419 = vunpack.c.l.b16 %v1167
    %v1420 = vunpack.c.h.b16 %v1167
    %v1421 = vunpack.c.l.b16 %v1168
    %v1422 = vunpack.c.l.b16 %v1169
    %v1423 = vunpack.c.h.b16 %v1169
    %v1424 = vunpack.c.l.b16 %v1170
    %v1425 = vunpack.c.l.b16 %v1171
    %v1426 = vunpack.c.h.b16 %v1171
    %v1427 = vunpack.c.l.b16 %v1172
    %v1428 = vunpack.c.l.b16 %v1173
    %v1429 = vunpack.c.h.b16 %v1173
    %v1430 = vunpack.c.l.b16 %v1174
    %v1431 = vunpack.c.l.b16 %v1175
    %v1432 = vunpack.c.h.b16 %v1175
    %v1433 = vunpack.c.l.b16 %v1176
    %v1434 = vunpack.c.l.b16 %v1177
    %v1435 = vunpack.c.h.b16 %v1177
    %v1436 = vunpack.c.l.b16 %v1178
    %v1437 = vunpack.c.l.b16 %v1179
    %v1438 = vunpack.c.h.b16 %v1179
    %v1439 = vunpack.c.l.b16 %v1180
    %v1440 = vunpack.c.l.b16 %v1181
    %v1441 = vunpack.c.h.b16 %v1181
    %v1442 = vunpack.c.l.b16 %v1182
    %v1443 = vunpack.c.l.b16 %v1183
    %v1444 = vunpack.c.h.b16 %v1183
    %v1445 = vunpack.c.l.b16 %v1184
    %v1446 = vunpack.c.l.b16 %v1185
    %v1447 = vunpack.c.h.b16 %v1185
    %v1448 = vunpack.c.l.b16 %v1186
    %v1449 = vunpack.c.l.b16 %v1187
    %v1450 = vunpack.c.h.b16 %v1187
    %v1451 = vunpack.c.l.b16 %v1188
    %v1452 = vunpack.c.l.b16 %v1189
    %v1453 = vunpack.c.h.b16 %v1189
    %v1454 = vunpack.c.l.b16 %v1190
    %v1455 = vunpack.c.l.b16 %v1191
    %v1456 = vunpack.c.h.b16 %v1191
    %v1457 = vunpack.c.l.b16 %v1192
    %v1458 = vunpack.c.l.b16 %v1193
    %v1459 = vunpack.c.h.b16 %v1193
    %v1460 = vunpack.c.l.b16 %v1194
    %v1461 = vpack.c.b16 %v1314, %v1311
    %v1462 = vpack.c.b16 %v1315, %v1312
    %v1463 = vpack.c.b16 %v1316, %v1313
    %v1464 = vpack.c.b16 %v1320, %v1317
    %v1465 = vpack.c.b16 %v1321, %v1318
    %v1466 = vpack.c.b16 %v1322, %v1319
    %v1467 = vpack.c.b16 %v1326, %v1323
    %v1468 = vpack.c.b16 %v1327, %v1324
    %v1469 = vpack.c.b16 %v1328, %v1325
    %v1470 = vpack.c.b16 %v1332, %v1329
    %v1471 = vpack.c.b16 %v1333, %v1330
    %v1472 = vpack.c.b16 %v1334, %v1331
    %v1473 = vpack.c.b16 %v1338, %v1335
    %v1474 = vpack.c.b16 %v1339, %v1336
    %v1475 = vpack.c.b16 %v1340, %v1337
    %v1476 = vpack.c.b16 %v1344, %v1341
    %v1477 = vpack.c.b16 %v1345, %v1342
    %v1478 = vpack.c.b16 %v1346, %v1343
    %v1479 = vpack.c.b16 %v1350, %v1347
    %v1480 = vpack.c.b16 %v1351, %v1348
    %v1481 = vpack.c.b16 %v1352, %v1349
    %v1482 = vpack.c.b16 %v1356, %v1353
    %v1483 = vpack.c.b16 %v1357, %v1354
    %v1484 = vpack.c.b16 %v1358, %v1355
    %v1485 = vpack.c.b16 %v1362, %v1359
    %v1486 = vpack.c.b16 %v1363, %v1360
    %v1487 = vpack.c.b16 %v1364, %v1361
    %v1488 = vpack.c.b16 %v1368, %v1365
    %v1489 = vpack.c.b16 %v1369, %v1366
    %v1490 = vpack.c.b16 %v1370, %v1367
    %v1491 = vpack.c.b16 %v1374, %v1371
    %v1492 = vpack.c.b16 %v1375, %v1372
    %v1493 = vpack.c.b16 %v1376, %v1373
    %v1494 = vpack.c.b16 %v1380, %v1377
    %v1495 = vpack.c.b16 %v1381, %v1378
    %v1496 = vpack.c.b16 %v1382, %v1379
    %v1497 = vpack.c.b16 %v1386, %v1383
    %v1498 = vpack.c.b16 %v1387, %v1384
    %v1499 = vpack.c.b16 %v1388, %v1385
    %v1500 = vpack.c.b16 %v1392, %v1389
    %v1501 = vpack.c.b16 %v1393, %v1390
    %v1502 = vpack.c.b16 %v1394, %v1391
    %v1503 = vpack.c.b16 %v1398, %v1395
    %v1504 = vpack.c.b16 %v1399, %v1396
    %v1505 = vpack.c.b16 %v1400, %v1397
    %v1506 = vpack.c.b16 %v1404, %v1401
    %v1507 = vpack.c.b16 %v1405, %v1402
    %v1508 = vpack.c.b16 %v1406, %v1403
    %v1509 = vpack.c.b16 %v1410, %v1407
    %v1510 = vpack.c.b16 %v1411, %v1408
    %v1511 = vpack.c.b16 %v1412, %v1409
    %v1512 = vpack.c.b16 %v1416, %v1413
    %v1513 = vpack.c.b16 %v1417, %v1414
    %v1514 = vpack.c.b16 %v1418, %v1415
    %v1515 = vpack.c.b16 %v1422, %v1419
    %v1516 = vpack.c.b16 %v1423, %v1420
    %v1517 = vpack.c.b16 %v1424, %v1421
    %v1518 = vpack.c.b16 %v1428, %v1425
    %v1519 = vpack.c.b16 %v1429, %v1426
    %v1520 = vpack.c.b16 %v1430, %v1427
    %v1521 = vpack.c.b16 %v1434, %v1431
    %v1522 = vpack.c.b16 %v1435, %v1432
    %v1523 = vpack.c.b16 %v1436, %v1433
    %v1524 = vpack.c.b16 %v1440, %v1437
    %v1525 = vpack.c.b16 %v1441, %v1438
    %v1526 = vpack.c.b16 %v1442, %v1439
    %v1527 = vpack.c.b16 %v1446, %v1443
    %v1528 = vpack.c.b16 %v1447, %v1444
    %v1529 = vpack.c.b16 %v1448, %v1445
    %v1530 = vpack.c.b16 %v1452, %v1449
    %v1531 = vpack.c.b16 %v1453, %v1450
    %v1532 = vpack.c.b16 %v1454, %v1451
    %v1533 = vpack.c.b16 %v1458, %v1455
    %v1534 = vpack.c.b16 %v1459, %v1456
    %v1535 = vpack.c.b16 %v1460, %v1457
    %v1612 = vsel %vm925, %v408, 0
    %1614 = vmatprep.subr.bf16.mxu0 %v1462
    %1615 = vmatpush1.bf16.msra.mxu0 %v1461
    %1616 = vmatprep.subr.bf16.mxu0 %v1465
    %1617 = vmatpush1.bf16.msra.mxu0 %v1464
    %1618 = vmatprep.subr.bf16.mxu0 %v1468
    %1619 = vmatpush1.bf16.msra.mxu0 %v1467
    %1620 = vmatprep.subr.bf16.mxu0 %v1471
    %1621 = vmatpush1.bf16.msra.mxu0 %v1470
    %1622 = vmatprep.subr.bf16.mxu0 %v1474
    %1623 = vmatpush1.bf16.msra.mxu0 %v1473
    %1624 = vmatprep.subr.bf16.mxu0 %v1477
    %1625 = vmatpush1.bf16.msra.mxu0 %v1476
    %1626 = vmatprep.subr.bf16.mxu0 %v1480
    %1627 = vmatpush1.bf16.msra.mxu0 %v1479
    %1628 = vmatprep.subr.bf16.mxu0 %v1483
    %1629 = vmatpush1.bf16.msra.mxu0 %v1482
    %1630 = vmatprep.subr.bf16.mxu0 %v1486
    %1631 = vmatpush1.bf16.msra.mxu0 %v1485
    %1632 = vmatprep.subr.bf16.mxu0 %v1489
    %1633 = vmatpush1.bf16.msra.mxu0 %v1488
    %1634 = vmatprep.subr.bf16.mxu0 %v1492
    %1635 = vmatpush1.bf16.msra.mxu0 %v1491
    %1636 = vmatprep.subr.bf16.mxu0 %v1495
    %1637 = vmatpush1.bf16.msra.mxu0 %v1494
    %1638 = vmatprep.subr.bf16.mxu0 %v1498
    %1639 = vmatpush1.bf16.msra.mxu0 %v1497
    %1640 = vmatprep.subr.bf16.mxu0 %v1501
    %1641 = vmatpush1.bf16.msra.mxu0 %v1500
    %1642 = vmatprep.subr.bf16.mxu0 %v1504
    %1643 = vmatpush1.bf16.msra.mxu0 %v1503
    %1644 = vmatprep.subr.bf16.mxu0 %v1507
    %1645 = vmatpush1.bf16.msra.mxu0 %v1506
    %1646 = vmatprep.mubr.bf16.mxu0 %v406
    %1647 = vmatmul.mubr.bf16.gmra.mrb[0].mxu0 %v405
    %v1648 = vpop.f32.mrb[0].mxu0
    %v1649 = vadd.f32 %v1199, %v1648
    %v1650 = vpop.f32.mrb[0].mxu0
    %v1651 = vadd.f32 %v1203, %v1650
    %v1652 = vpop.f32.mrb[0].mxu0
    %v1653 = vpop.f32.mrb[0].mxu0
    %1654 = vdwg.mxu0
    %1655 = vmatprep.subr.bf16.mxu0 %v1510
    %1656 = vmatpush1.bf16.msra.mxu0 %v1509
    %1657 = vmatprep.subr.bf16.mxu0 %v1513
    %1658 = vmatpush1.bf16.msra.mxu0 %v1512
    %1659 = vmatprep.subr.bf16.mxu0 %v1516
    %1660 = vmatpush1.bf16.msra.mxu0 %v1515
    %1661 = vmatprep.subr.bf16.mxu0 %v1519
    %1662 = vmatpush1.bf16.msra.mxu0 %v1518
    %1663 = vmatprep.subr.bf16.mxu0 %v1522
    %1664 = vmatpush1.bf16.msra.mxu0 %v1521
    %1665 = vmatprep.subr.bf16.mxu0 %v1525
    %1666 = vmatpush1.bf16.msra.mxu0 %v1524
    %1667 = vmatprep.subr.bf16.mxu0 %v1528
    %1668 = vmatpush1.bf16.msra.mxu0 %v1527
    %1669 = vmatprep.subr.bf16.mxu0 %v1531
    %1670 = vmatpush1.bf16.msra.mxu0 %v1530
    %1671 = vmatprep.subr.bf16.mxu0 %v1534
    %1672 = vmatpush1.bf16.msra.mxu0 %v1533
    %1673 = vmatprep.subr.bf16.mxu0 0
    %1674 = vmatpush1.bf16.msra.mxu0 0
    %1675 = vmatprep.subr.bf16.mxu0 0
    %1676 = vmatpush1.bf16.msra.mxu0 0
    %1677 = vmatprep.subr.bf16.mxu0 0
    %1678 = vmatpush1.bf16.msra.mxu0 0
    %1679 = vmatprep.subr.bf16.mxu0 0
    %1680 = vmatpush1.bf16.msra.mxu0 0
    %1681 = vmatprep.subr.bf16.mxu0 0
    %1682 = vmatpush1.bf16.msra.mxu0 0
    %1683 = vmatprep.subr.bf16.mxu0 0
    %1684 = vmatpush1.bf16.msra.mxu0 0
    %1685 = vmatprep.subr.bf16.mxu0 0
    %1686 = vmatpush1.bf16.msra.mxu0 0
    %1687 = vmatprep.mubr.bf16.mxu0 %v1612
    %1688 = vmatmul.mubr.bf16.gmra.mrb[0].mxu0 %v407
    %v1689 = vpop.f32.mrb[0].mxu0
    %v1690 = vadd.f32 %v1649, %v1689
    %v1691 = vpop.f32.mrb[0].mxu0
    %v1692 = vadd.f32 %v1651, %v1691
    %v1693 = vpop.f32.mrb[0].mxu0
    %v1694 = vpop.f32.mrb[0].mxu0
    %1695 = vdwg.mxu0
    %1696 = vmatprep.subr.bf16.mxu0 0
    %1697 = vmatpush1.bf16.msra.mxu0 %v1463
    %1698 = vmatprep.subr.bf16.mxu0 0
    %1699 = vmatpush1.bf16.msra.mxu0 %v1466
    %1700 = vmatprep.subr.bf16.mxu0 0
    %1701 = vmatpush1.bf16.msra.mxu0 %v1469
    %1702 = vmatprep.subr.bf16.mxu0 0
    %1703 = vmatpush1.bf16.msra.mxu0 %v1472
    %1704 = vmatprep.subr.bf16.mxu0 0
    %1705 = vmatpush1.bf16.msra.mxu0 %v1475
    %1706 = vmatprep.subr.bf16.mxu0 0
    %1707 = vmatpush1.bf16.msra.mxu0 %v1478
    %1708 = vmatprep.subr.bf16.mxu0 0
    %1709 = vmatpush1.bf16.msra.mxu0 %v1481
    %1710 = vmatprep.subr.bf16.mxu0 0
    %1711 = vmatpush1.bf16.msra.mxu0 %v1484
    %1712 = vmatprep.subr.bf16.mxu0 0
    %1713 = vmatpush1.bf16.msra.mxu0 %v1487
    %1714 = vmatprep.subr.bf16.mxu0 0
    %1715 = vmatpush1.bf16.msra.mxu0 %v1490
    %1716 = vmatprep.subr.bf16.mxu0 0
    %1717 = vmatpush1.bf16.msra.mxu0 %v1493
    %1718 = vmatprep.subr.bf16.mxu0 0
    %1719 = vmatpush1.bf16.msra.mxu0 %v1496
    %1720 = vmatprep.subr.bf16.mxu0 0
    %1721 = vmatpush1.bf16.msra.mxu0 %v1499
    %1722 = vmatprep.subr.bf16.mxu0 0
    %1723 = vmatpush1.bf16.msra.mxu0 %v1502
    %1724 = vmatprep.subr.bf16.mxu0 0
    %1725 = vmatpush1.bf16.msra.mxu0 %v1505
    %1726 = vmatprep.subr.bf16.mxu0 0
    %1727 = vmatpush1.bf16.msra.mxu0 %v1508
    %1728 = vmatprep.mubr.bf16.mxu0 %v406
    %1729 = vmatmul.mubr.bf16.gmra.mrb[0].mxu0 %v405
    %v1730 = vpop.f32.mrb[0].mxu0
    %v1731 = vadd.f32 %v1207, %v1730
    %v1732 = vpop.f32.mrb[0].mxu0
    %v1733 = vpop.f32.mrb[0].mxu0
    %v1734 = vpop.f32.mrb[0].mxu0
    %1735 = vdwg.mxu0
    %1736 = vmatprep.subr.bf16.mxu0 0
    %1737 = vmatpush1.bf16.msra.mxu0 %v1511
    %1738 = vmatprep.subr.bf16.mxu0 0
    %1739 = vmatpush1.bf16.msra.mxu0 %v1514
    %1740 = vmatprep.subr.bf16.mxu0 0
    %1741 = vmatpush1.bf16.msra.mxu0 %v1517
    %1742 = vmatprep.subr.bf16.mxu0 0
    %1743 = vmatpush1.bf16.msra.mxu0 %v1520
    %1744 = vmatprep.subr.bf16.mxu0 0
    %1745 = vmatpush1.bf16.msra.mxu0 %v1523
    %1746 = vmatprep.subr.bf16.mxu0 0
    %1747 = vmatpush1.bf16.msra.mxu0 %v1526
    %1748 = vmatprep.subr.bf16.mxu0 0
    %1749 = vmatpush1.bf16.msra.mxu0 %v1529
    %1750 = vmatprep.subr.bf16.mxu0 0
    %1751 = vmatpush1.bf16.msra.mxu0 %v1532
    %1752 = vmatprep.subr.bf16.mxu0 0
    %1753 = vmatpush1.bf16.msra.mxu0 %v1535
    %1754 = vmatprep.subr.bf16.mxu0 0
    %1755 = vmatpush1.bf16.msra.mxu0 0
    %1756 = vmatprep.subr.bf16.mxu0 0
    %1757 = vmatpush1.bf16.msra.mxu0 0
    %1758 = vmatprep.subr.bf16.mxu0 0
    %1759 = vmatpush1.bf16.msra.mxu0 0
    %1760 = vmatprep.subr.bf16.mxu0 0
    %1761 = vmatpush1.bf16.msra.mxu0 0
    %1762 = vmatprep.subr.bf16.mxu0 0
    %1763 = vmatpush1.bf16.msra.mxu0 0
    %1764 = vmatprep.subr.bf16.mxu0 0
    %1765 = vmatpush1.bf16.msra.mxu0 0
    %1766 = vmatprep.subr.bf16.mxu0 0
    %1767 = vmatpush1.bf16.msra.mxu0 0
    %1768 = vmatprep.mubr.bf16.mxu0 %v1612
    %1769 = vmatmul.mubr.bf16.gmra.mrb[0].mxu0 %v407
    %v1770 = vpop.f32.mrb[0].mxu0
    %v1771 = vadd.f32 %v1731, %v1770
    %v1772 = vpop.f32.mrb[0].mxu0
    %v1773 = vpop.f32.mrb[0].mxu0
    %v1774 = vpop.f32.mrb[0].mxu0
    %1775 = vdwg.mxu0
    %v1776 = vmax.f32 %v1690, 0.0
    %v1777 = vmax.f32 %v1692, 0.0
    %v1778 = vmax.f32 %v1771, 0.0
    %v1780 = vlaneseq
    %v1781 = vshrl.u32 %v1780, 7
    %v1782 = vsub.s32 0, %v1781
    %v1783 = vrot.slane %v78, %v1782
    %v1784 = vlaneseq
    %v1785 = vshrl.u32 %v1784, 7
    %v1786 = vsub.s32 1, %v1785
    %v1787 = vrot.slane %v78, %v1786
    %v1788 = vlaneseq
    %v1789 = vshrl.u32 %v1788, 7
    %v1790 = vsub.s32 2, %v1789
    %v1791 = vrot.slane %v78, %v1790
    %v1795 = vmul.f32 %v1091, %v1783
    %v1796 = vmul.f32 %v1092, %v1787
    %v1797 = vmul.f32 %v1093, %v1791
    %v1798 = vadd.f32 %v1795, %v1796
    %vm1799 = vcmask 359424
    %v1800 = vsel %vm1799, %v1797, 0.0
    %v1801 = vadd.f32 %v1798, %v1800
    %1802 = vadd.xlane.f32.xlu0 %v1801
    %v1803 = vpop.xlane.xlu0 %1802
    %v1804 = vadd.f32 %v1803, %v81
    %v1806 = vlaneseq
    %v1807 = vshrl.u32 %v1806, 7
    %v1808 = vsub.s32 0, %v1807
    %v1809 = vrot.slane %v80, %v1808
    %v1810 = vlaneseq
    %v1811 = vshrl.u32 %v1810, 7
    %v1812 = vsub.s32 1, %v1811
    %v1813 = vrot.slane %v80, %v1812
    %v1814 = vlaneseq
    %v1815 = vshrl.u32 %v1814, 7
    %v1816 = vsub.s32 2, %v1815
    %v1817 = vrot.slane %v80, %v1816
    %v1821 = vmul.f32 %v1776, %v1809
    %v1822 = vmul.f32 %v1777, %v1813
    %v1823 = vmul.f32 %v1778, %v1817
    %v1824 = vadd.f32 %v1821, %v1822
    %v1825 = vsel %vm1799, %v1823, 0.0
    %v1826 = vadd.f32 %v1824, %v1825
    %1827 = vadd.xlane.f32.xlu0 %v1826
    %v1828 = vpop.xlane.xlu0 %1827
    %v1829 = vadd.f32 %v1828, %v81
    %1831 = vrot.lane.b32.xlu0 %v1829, 127
    %v1832 = vpop.permute.xlu0 %1831
    %v1834 = vsub.f32 %v1804, %v1832
    %v1835 = vand.u32 2147483647, %v1834
    %v1836 = vmul.f32 %v1835, 0.5
    %v1837 = vlaneseq
    %v1838 = vand.u32 %v1837, 127
    %vm1839 = vcmp.eq.s32.totalorder %v1838, 0
    %vm1840 = vcmp.eq.s32.totalorder %v1838, 1
    %vm1841 = vcmp.eq.s32.totalorder %v1838, 2
    %1843 = vset.pattern.permute.xlu0 0
    %1844 = vperm.xlu0 %1843, %v1836
    %v1845 = vpop.permute.xlu0 %1844
    %v1847 = vsel %vm1841, %v1845, 0.0
    %1848 = vset.pattern.permute.xlu0 1
    %1849 = vperm.xlu0 %1848, %v1829
    %v1850 = vpop.permute.xlu0 %1849
    %v1852 = vsel %vm1840, %v1850, %v1847
    %1854 = vset.pattern.permute.xlu0 0
    %1855 = vperm.xlu0 %1854, %v1804
    %v1856 = vpop.permute.xlu0 %1855
    %v1858 = vsel %vm1839, %v1856, %v1852
    %vm1859 = vcmask 64512
    %1860 = vst.msk [vmem:[#allocation10] sm:$0xff] %vm1859, %v1858
    // Predicated region
    $region34: #{tpu_custom_call.1} parent=1 // pred_check
      _
    $region35: #{tpu_custom_call.1} parent=1 // pred_check_branch
      %1862 = sbr.rel (0) target = $region37
    $region36: #{tpu_custom_call.1} parent=1 // pred_region
      %s1864 = ssub.s32 128, 128
      %1865 = vsyncadd [#allocation4], %s1864
      %s1867 = sshll.u32 [#allocation10], 4
      %s1868 = int_to_ptr.vmem [resolvable:$true] %s1867
      %1870 = dma.vmem_to_hbm [thread:$0]  %s1868, 128, %s4, [#allocation4]
    $region37: #{tpu_custom_call.1} parent=1 // pred_fallthru
      _
    // Predicated region
    $region38: #{tpu_custom_call.1} parent=1 // pred_check
      _
    $region39: #{tpu_custom_call.1} parent=1 // pred_check_branch
      %1872 = sbr.rel (0) target = $region41
    $region40: #{tpu_custom_call.1} parent=1 // pred_region
      %1873 = dma.done [#allocation4], 128
    $region41: #{tpu_custom_call.1} parent=1 // pred_fallthru
      _
    %1874 = vsyncpa [#allocation3], 1
    %1875 = vsyncpa [#allocation6], 1
    %1876 = vsyncpa [#allocation9], 1
    %1877 = vsyncpa [#allocation4], 1

</llo_original>
